<compile_context>
chip_gen: v7x
topology: tpu7x:2x2x1
jax: 0.10.0
libtpu: 0.0.40
codegen_flags: <defaults>
</compile_context>

<pallas_src>
import functools

import jax
import jax.numpy as jnp
from jax.experimental import pallas as pl
from jax.experimental.pallas import tpu as pltpu

# ---- "configure" constants (synthetic, deterministic) -----------------------
MODEL_NUM = 2
INPUT_CHANNEL_LIST = (2, 2)          # sum = 4 input channels
C_TOTAL = sum(INPUT_CHANNEL_LIST)
BACKBONE_OUT_CHANNELS = (32, 32)     # backbone_out_channel_list
F_TOTAL = sum(BACKBONE_OUT_CHANNELS) # backbone_out_channel_sum = fc_channel
CLASS_NUM = 10
# ina_type = None, dropout_rate = None  -> concat + fc path, no dropout


def _full_spec(shape):
    """Whole-array block (block_shape == array dims satisfies TPU tiling rule)."""
    return pl.BlockSpec(shape, lambda *_: (0,) * len(shape))


# --------------------------- fused forward kernel ----------------------------
def _fused_kernel(x_ref, w1_ref, b1_ref, w2_ref, b2_ref, w3_ref, b3_ref,
                  wfc_ref, bfc_ref, out_ref, *, n, hw):
    """Single fused pass over the block-diagonally packed backbones + FC.

    Layout: activations are (channels, N*HW) -- channels on sublanes, the
    batch*spatial axis (multiple of 128) on lanes, so every vreg is lane-dense
    and the pointwise convs are plain 2-D MXU matmuls.  Because the off-
    diagonal blocks of w1/w2/w3 are zero, the fused matmuls are exactly the
    per-model torch.split(...) backbones, and the fused (F_TOTAL, N) feature
    block IS torch.concat(feature, dim=1) (transposed), so one FC matmul
    finishes the job.
    """
    x = x_ref[...]                                             # (C_total, S) bf16

    # stem: block-diag pointwise conv + bias + ReLU -> (F_TOTAL, S) f32
    h = jnp.dot(w1_ref[...], x, preferred_element_type=jnp.float32)
    h = jnp.maximum(h + b1_ref[...], 0.0)
    hb = h.astype(jnp.bfloat16)          # cast ONCE; reused for w2 matmul + skip

    # residual block: two block-diag pointwise convs + skip + ReLU
    r = jnp.dot(w2_ref[...], hb, preferred_element_type=jnp.float32)
    r = jnp.maximum(r + b2_ref[...], 0.0)
    r = jnp.dot(w3_ref[...], r.astype(jnp.bfloat16),
                preferred_element_type=jnp.float32)
    r = r + b3_ref[...]
    a = jnp.maximum(hb + r, 0.0)         # bf16 + f32 -> f32 skip accumulation

    # global average pool ("removeFC" output): lane-aligned reshape + lane-axis
    # reduction on the XLU (HW is a multiple of 128), scaled in f32.
    pooled = jnp.sum(a.reshape(F_TOTAL, n, hw), axis=-1) * (1.0 / hw)  # (F, N)

    # concat(features) + Linear: one (class_num, F_TOTAL) x (F_TOTAL, N) matmul
    # with the bias as a (class_num, 1) lane-broadcast column.
    out_ref[...] = (jnp.dot(wfc_ref[...], pooled,
                            preferred_element_type=jnp.float32)
                    + bfc_ref[...])                            # (class_num, N)


# ------------------------------ python wrapper --------------------------------
def concat_resnet_forward(x, params):
    """x: (N, C_total, H, W) float32 -> logits (N, class_num) float32."""
    N, c_total, H, W = x.shape
    assert c_total == C_TOTAL
    hw = H * W
    S = N * hw

    # ONE transpose of the full input to (C_total, N*H*W) + bf16 cast (NCHW
    # keeps H*W minor, so this is only an N<->C swap, not a full NHWC
    # relayout); torch.split happens implicitly via the block-diagonal w1.
    xt = jnp.transpose(x, (1, 0, 2, 3)).reshape(c_total, S).astype(jnp.bfloat16)

    w1, b1, w2, b2, w3, b3 = params['backbone']
    wfc, bfc = params['fc']
    inputs = [xt, w1, b1, w2, b2, w3, b3, wfc, bfc]

    kernel = functools.partial(_fused_kernel, n=N, hw=hw)

    # TODO(synk): (10, N) output is a masked partial store + wrapper transpose;
    # negligible at this size, revisit (lane-dense output) once batch grows.
    out_t = pl.pallas_call(
        kernel,
        out_shape=jax.ShapeDtypeStruct((CLASS_NUM, N), jnp.float32),
        grid=(1,),
        in_specs=[_full_spec(a.shape) for a in inputs],
        out_specs=_full_spec((CLASS_NUM, N)),
        compiler_params=pltpu.CompilerParams(
            dimension_semantics=("arbitrary",)),
    )(*inputs)
    return out_t.T                                             # (N, class_num)


# ------------------------------ parameters ------------------------------------
def _block_diag(blocks, dtype):
    rows = sum(b.shape[0] for b in blocks)
    cols = sum(b.shape[1] for b in blocks)
    out = jnp.zeros((rows, cols), jnp.float32)
    r = c = 0
    for b in blocks:
        out = out.at[r:r + b.shape[0], c:c + b.shape[1]].set(b)
        r += b.shape[0]
        c += b.shape[1]
    return out.astype(dtype)


def init_params(key):
    """Per-model backbone weights, packed block-diagonally for the fused kernel."""
    w1b, w2b, w3b = [], [], []
    for i in range(MODEL_NUM):
        key, k1, k2, k3 = jax.random.split(key, 4)
        cin = INPUT_CHANNEL_LIST[i]
        f = BACKBONE_OUT_CHANNELS[i]
        # weights stored pre-transposed (out_ch, in_ch) for y = W @ x in the
        # lane-dense (channels, spatial) layout.
        w1b.append(jax.random.normal(k1, (f, cin), jnp.float32) * 0.1)
        w2b.append(jax.random.normal(k2, (f, f), jnp.float32) * 0.1)
        w3b.append(jax.random.normal(k3, (f, f), jnp.float32) * 0.1)

    # block-diagonal packing == MODEL_NUM independent backbones in one matmul
    w1 = _block_diag(w1b, jnp.bfloat16)                  # (F_TOTAL, C_TOTAL)
    w2 = _block_diag(w2b, jnp.bfloat16)                  # (F_TOTAL, F_TOTAL)
    w3 = _block_diag(w3b, jnp.bfloat16)                  # (F_TOTAL, F_TOTAL)
    b1 = jnp.zeros((F_TOTAL, 1), jnp.float32)            # stacked per-model biases
    b2 = jnp.zeros((F_TOTAL, 1), jnp.float32)
    b3 = jnp.zeros((F_TOTAL, 1), jnp.float32)

    key, kf = jax.random.split(key)
    # torch.nn.Linear(fc_channel, class_num).weight has shape
    # (class_num, fc_channel) -- exactly the layout the fused kernel consumes;
    # its columns [0:32] / [32:64] are model 0 / model 1 (the concat order).
    wfc = jax.random.normal(kf, (CLASS_NUM, F_TOTAL), jnp.float32) * 0.05
    bfc = jnp.zeros((CLASS_NUM, 1), jnp.float32)

    return {'backbone': (w1, b1, w2, b2, w3, b3), 'fc': (wfc, bfc)}


if __name__ == "__main__":
    key = jax.random.PRNGKey(0)
    key, kx = jax.random.split(key)
    # NCHW input: batch=2, channels=sum(INPUT_CHANNEL_LIST)=4, spatial=16x16
    x = jax.random.normal(kx, (2, C_TOTAL, 16, 16), jnp.float32)
    params = init_params(key)

    out = jax.jit(concat_resnet_forward)(x, params)
    out = jax.block_until_ready(out)
    assert out.shape == (2, CLASS_NUM), out.shape
    print("KERNEL_OK")
</pallas_src>

<mosaic_0001>
module attributes {stable_mosaic.version = 11 : i64} {
  func.func @_fused_kernel(%arg0: i32, %arg1: memref<4x512xbf16, #tpu.memory_space<vmem>>, %arg2: memref<64x4xbf16, #tpu.memory_space<vmem>>, %arg3: memref<64x1xf32, #tpu.memory_space<vmem>>, %arg4: memref<64x64xbf16, #tpu.memory_space<vmem>>, %arg5: memref<64x1xf32, #tpu.memory_space<vmem>>, %arg6: memref<64x64xbf16, #tpu.memory_space<vmem>>, %arg7: memref<64x1xf32, #tpu.memory_space<vmem>>, %arg8: memref<10x64xf32, #tpu.memory_space<vmem>>, %arg9: memref<10x1xf32, #tpu.memory_space<vmem>>, %arg10: memref<10x2xf32, #tpu.memory_space<vmem>>) attributes {dimension_semantics = [#tpu.dimension_semantics<arbitrary>], iteration_bounds = array<i64: 1>, scalar_prefetch = 0 : i64, scratch_operands = 0 : i64, tpu.core_type = #tpu.core_type<tc>, window_params = [{pipeline_mode = #tpu.pipeline_mode<synchronous>, transform_indices = @transform_0, window_bounds = array<i64: 4, 512>}, {pipeline_mode = #tpu.pipeline_mode<synchronous>, transform_indices = @transform_1, window_bounds = array<i64: 64, 4>}, {pipeline_mode = #tpu.pipeline_mode<synchronous>, transform_indices = @transform_2, window_bounds = array<i64: 64, 1>}, {pipeline_mode = #tpu.pipeline_mode<synchronous>, transform_indices = @transform_3, window_bounds = array<i64: 64, 64>}, {pipeline_mode = #tpu.pipeline_mode<synchronous>, transform_indices = @transform_4, window_bounds = array<i64: 64, 1>}, {pipeline_mode = #tpu.pipeline_mode<synchronous>, transform_indices = @transform_5, window_bounds = array<i64: 64, 64>}, {pipeline_mode = #tpu.pipeline_mode<synchronous>, transform_indices = @transform_6, window_bounds = array<i64: 64, 1>}, {pipeline_mode = #tpu.pipeline_mode<synchronous>, transform_indices = @transform_7, window_bounds = array<i64: 10, 64>}, {pipeline_mode = #tpu.pipeline_mode<synchronous>, transform_indices = @transform_8, window_bounds = array<i64: 10, 1>}, {pipeline_mode = #tpu.pipeline_mode<synchronous>, transform_indices = @transform_9, window_bounds = array<i64: 10, 2>}]} {
    %c0 = arith.constant 0 : index
    %c0_0 = arith.constant 0 : index
    %0 = vector.load %arg1[%c0, %c0_0] : memref<4x512xbf16, #tpu.memory_space<vmem>>, vector<4x512xbf16>
    %c0_1 = arith.constant 0 : index
    %c0_2 = arith.constant 0 : index
    %1 = vector.load %arg2[%c0_1, %c0_2] : memref<64x4xbf16, #tpu.memory_space<vmem>>, vector<64x4xbf16>
    %cst = arith.constant dense<0.000000e+00> : vector<64x512xf32>
    %2 = tpu.matmul %1, %0, %cst {dimension_numbers = #tpu.dot_dimension_numbers<[1], [0], [0], [1], [0, 0, 1, 1], [], []>} : vector<64x4xbf16>, vector<4x512xbf16>, vector<64x512xf32> -> vector<64x512xf32>
    %c0_3 = arith.constant 0 : index
    %c0_4 = arith.constant 0 : index
    %3 = vector.load %arg3[%c0_3, %c0_4] : memref<64x1xf32, #tpu.memory_space<vmem>>, vector<64x1xf32>
    %4 = vector.broadcast %3 : vector<64x1xf32> to vector<64x512xf32>
    %5 = arith.addf %2, %4 : vector<64x512xf32>
    %cst_5 = arith.constant 0.000000e+00 : f32
    %6 = vector.broadcast %cst_5 : f32 to vector<64x512xf32>
    %7 = arith.maximumf %5, %6 : vector<64x512xf32>
    %8 = arith.truncf %7 : vector<64x512xf32> to vector<64x512xbf16>
    %c0_6 = arith.constant 0 : index
    %c0_7 = arith.constant 0 : index
    %9 = vector.load %arg4[%c0_6, %c0_7] : memref<64x64xbf16, #tpu.memory_space<vmem>>, vector<64x64xbf16>
    %cst_8 = arith.constant dense<0.000000e+00> : vector<64x512xf32>
    %10 = tpu.matmul %9, %8, %cst_8 {dimension_numbers = #tpu.dot_dimension_numbers<[1], [0], [0], [1], [0, 0, 1, 1], [], []>} : vector<64x64xbf16>, vector<64x512xbf16>, vector<64x512xf32> -> vector<64x512xf32>
    %c0_9 = arith.constant 0 : index
    %c0_10 = arith.constant 0 : index
    %11 = vector.load %arg5[%c0_9, %c0_10] : memref<64x1xf32, #tpu.memory_space<vmem>>, vector<64x1xf32>
    %12 = vector.broadcast %11 : vector<64x1xf32> to vector<64x512xf32>
    %13 = arith.addf %10, %12 : vector<64x512xf32>
    %cst_11 = arith.constant 0.000000e+00 : f32
    %14 = vector.broadcast %cst_11 : f32 to vector<64x512xf32>
    %15 = arith.maximumf %13, %14 : vector<64x512xf32>
    %c0_12 = arith.constant 0 : index
    %c0_13 = arith.constant 0 : index
    %16 = vector.load %arg6[%c0_12, %c0_13] : memref<64x64xbf16, #tpu.memory_space<vmem>>, vector<64x64xbf16>
    %17 = arith.truncf %15 : vector<64x512xf32> to vector<64x512xbf16>
    %cst_14 = arith.constant dense<0.000000e+00> : vector<64x512xf32>
    %18 = tpu.matmul %16, %17, %cst_14 {dimension_numbers = #tpu.dot_dimension_numbers<[1], [0], [0], [1], [0, 0, 1, 1], [], []>} : vector<64x64xbf16>, vector<64x512xbf16>, vector<64x512xf32> -> vector<64x512xf32>
    %c0_15 = arith.constant 0 : index
    %c0_16 = arith.constant 0 : index
    %19 = vector.load %arg7[%c0_15, %c0_16] : memref<64x1xf32, #tpu.memory_space<vmem>>, vector<64x1xf32>
    %20 = vector.broadcast %19 : vector<64x1xf32> to vector<64x512xf32>
    %21 = arith.addf %18, %20 : vector<64x512xf32>
    %22 = arith.extf %8 : vector<64x512xbf16> to vector<64x512xf32>
    %23 = arith.addf %22, %21 : vector<64x512xf32>
    %cst_17 = arith.constant 0.000000e+00 : f32
    %24 = vector.broadcast %cst_17 : f32 to vector<64x512xf32>
    %25 = arith.maximumf %23, %24 : vector<64x512xf32>
    %26 = vector.shape_cast %25 : vector<64x512xf32> to vector<64x2x256xf32>
    %cst_18 = arith.constant dense<0.000000e+00> : vector<64x2xf32>
    %27 = vector.multi_reduction <add>, %26, %cst_18 [2] : vector<64x2x256xf32> to vector<64x2xf32>
    %cst_19 = arith.constant 3.906250e-03 : f32
    %28 = vector.broadcast %cst_19 : f32 to vector<64x2xf32>
    %29 = arith.mulf %27, %28 : vector<64x2xf32>
    %c0_20 = arith.constant 0 : index
    %c0_21 = arith.constant 0 : index
    %30 = vector.load %arg8[%c0_20, %c0_21] : memref<10x64xf32, #tpu.memory_space<vmem>>, vector<10x64xf32>
    %cst_22 = arith.constant dense<0.000000e+00> : vector<10x2xf32>
    %31 = tpu.matmul %30, %29, %cst_22 {dimension_numbers = #tpu.dot_dimension_numbers<[1], [0], [0], [1], [0, 0, 1, 1], [], []>} : vector<10x64xf32>, vector<64x2xf32>, vector<10x2xf32> -> vector<10x2xf32>
    %c0_23 = arith.constant 0 : index
    %c0_24 = arith.constant 0 : index
    %32 = vector.load %arg9[%c0_23, %c0_24] : memref<10x1xf32, #tpu.memory_space<vmem>>, vector<10x1xf32>
    %33 = vector.broadcast %32 : vector<10x1xf32> to vector<10x2xf32>
    %34 = arith.addf %31, %33 : vector<10x2xf32>
    %c0_25 = arith.constant 0 : index
    %c0_26 = arith.constant 0 : index
    %35 = vector.load %arg10[%c0_25, %c0_26] : memref<10x2xf32, #tpu.memory_space<vmem>>, vector<10x2xf32>
    tpu.vector_store %arg10[%c0_25, %c0_26], %34 {strides = array<i32>} : memref<10x2xf32, #tpu.memory_space<vmem>>, vector<10x2xf32>,
    return
  }
  func.func @transform_0(%arg0: i32) -> (i32, i32) {
    %c0_i32 = arith.constant 0 : i32
    %c0_i32_0 = arith.constant 0 : i32
    %c0_i32_1 = arith.constant 0 : i32
    return %c0_i32, %c0_i32_0 : i32, i32
  }
  func.func @transform_1(%arg0: i32) -> (i32, i32) {
    %c0_i32 = arith.constant 0 : i32
    %c0_i32_0 = arith.constant 0 : i32
    %c0_i32_1 = arith.constant 0 : i32
    return %c0_i32, %c0_i32_0 : i32, i32
  }
  func.func @transform_2(%arg0: i32) -> (i32, i32) {
    %c0_i32 = arith.constant 0 : i32
    %c0_i32_0 = arith.constant 0 : i32
    %c0_i32_1 = arith.constant 0 : i32
    return %c0_i32, %c0_i32_0 : i32, i32
  }
  func.func @transform_3(%arg0: i32) -> (i32, i32) {
    %c0_i32 = arith.constant 0 : i32
    %c0_i32_0 = arith.constant 0 : i32
    %c0_i32_1 = arith.constant 0 : i32
    return %c0_i32, %c0_i32_0 : i32, i32
  }
  func.func @transform_4(%arg0: i32) -> (i32, i32) {
    %c0_i32 = arith.constant 0 : i32
    %c0_i32_0 = arith.constant 0 : i32
    %c0_i32_1 = arith.constant 0 : i32
    return %c0_i32, %c0_i32_0 : i32, i32
  }
  func.func @transform_5(%arg0: i32) -> (i32, i32) {
    %c0_i32 = arith.constant 0 : i32
    %c0_i32_0 = arith.constant 0 : i32
    %c0_i32_1 = arith.constant 0 : i32
    return %c0_i32, %c0_i32_0 : i32, i32
  }
  func.func @transform_6(%arg0: i32) -> (i32, i32) {
    %c0_i32 = arith.constant 0 : i32
    %c0_i32_0 = arith.constant 0 : i32
    %c0_i32_1 = arith.constant 0 : i32
    return %c0_i32, %c0_i32_0 : i32, i32
  }
  func.func @transform_7(%arg0: i32) -> (i32, i32) {
    %c0_i32 = arith.constant 0 : i32
    %c0_i32_0 = arith.constant 0 : i32
    %c0_i32_1 = arith.constant 0 : i32
    return %c0_i32, %c0_i32_0 : i32, i32
  }
  func.func @transform_8(%arg0: i32) -> (i32, i32) {
    %c0_i32 = arith.constant 0 : i32
    %c0_i32_0 = arith.constant 0 : i32
    %c0_i32_1 = arith.constant 0 : i32
    return %c0_i32, %c0_i32_0 : i32, i32
  }
  func.func @transform_9(%arg0: i32) -> (i32, i32) {
    %c0_i32 = arith.constant 0 : i32
    %c0_i32_0 = arith.constant 0 : i32
    %c0_i32_1 = arith.constant 0 : i32
    return %c0_i32, %c0_i32_0 : i32, i32
  }
}

</mosaic_0001>

<llo_original>
// kernel: concat_resnet_forward.1
$region0: #{concat_resnet_forward.1}
  #allocation0 [shape = 'u32[]', space=smem, size = 0x4, offset = 0x4, fixed_abs, tag = 'smem constant byte address 0x4 - core index']
  #allocation1 [shape = 'u32[144,128]{1,0:T(1,128)}', space=vmem, size = 0x12000, scoped, tag = 'internal scratch']
  %s0 = inlined_call_operand.vmem [shape: bf16[4,512], index: 0, kind: input, shape index: {}]
  %s1 = inlined_call_operand.vmem [shape: bf16[64,4], index: 1, kind: input, shape index: {}]
  %s2 = inlined_call_operand.vmem [shape: f32[64,1], index: 2, kind: input, shape index: {}]
  %s3 = inlined_call_operand.vmem [shape: bf16[64,64], index: 3, kind: input, shape index: {}]
  %s4 = inlined_call_operand.vmem [shape: f32[64,1], index: 4, kind: input, shape index: {}]
  %s5 = inlined_call_operand.vmem [shape: bf16[64,64], index: 5, kind: input, shape index: {}]
  %s6 = inlined_call_operand.vmem [shape: f32[64,1], index: 6, kind: input, shape index: {}]
  %s7 = inlined_call_operand.vmem [shape: f32[10,64], index: 7, kind: input, shape index: {}]
  %s8 = inlined_call_operand.vmem [shape: f32[10,1], index: 8, kind: input, shape index: {}]
  %s9 = inlined_call_operand.vmem [shape: f32[10,2], index: 9, kind: output, shape index: {}]
  %s10 = sld [smem:[#allocation0]]
  $region46: #{concat_resnet_forward.1} parent=0
    _
  %s12 = ssub.s32 1, %s10
  %s13 = scalar_select 0, %s12, %s10
  // Predicated region
  $region2: #{concat_resnet_forward.1} parent=0 // pred_check
    _
  $region3: #{concat_resnet_forward.1} parent=0 // pred_check_branch
    %15 = sbr.rel (0) target = $region5
  $region4: #{concat_resnet_forward.1} parent=0 // pred_region
    _
  $region5: #{concat_resnet_forward.1} parent=0 // pred_fallthru
    _
  // Predicated region
  $region6: #{concat_resnet_forward.1} parent=0 // pred_check
    _
  $region7: #{concat_resnet_forward.1} parent=0 // pred_check_branch
    %17 = sbr.rel (0) target = $region9
  $region8: #{concat_resnet_forward.1} parent=0 // pred_region
    _
  $region9: #{concat_resnet_forward.1} parent=0 // pred_fallthru
    _
  // Predicated region
  $region10: #{concat_resnet_forward.1} parent=0 // pred_check
    _
  $region11: #{concat_resnet_forward.1} parent=0 // pred_check_branch
    %19 = sbr.rel (0) target = $region13
  $region12: #{concat_resnet_forward.1} parent=0 // pred_region
    _
  $region13: #{concat_resnet_forward.1} parent=0 // pred_fallthru
    _
  // Predicated region
  $region14: #{concat_resnet_forward.1} parent=0 // pred_check
    _
  $region15: #{concat_resnet_forward.1} parent=0 // pred_check_branch
    %21 = sbr.rel (0) target = $region17
  $region16: #{concat_resnet_forward.1} parent=0 // pred_region
    _
  $region17: #{concat_resnet_forward.1} parent=0 // pred_fallthru
    _
  // Predicated region
  $region18: #{concat_resnet_forward.1} parent=0 // pred_check
    _
  $region19: #{concat_resnet_forward.1} parent=0 // pred_check_branch
    %23 = sbr.rel (0) target = $region21
  $region20: #{concat_resnet_forward.1} parent=0 // pred_region
    _
  $region21: #{concat_resnet_forward.1} parent=0 // pred_fallthru
    _
  // Predicated region
  $region22: #{concat_resnet_forward.1} parent=0 // pred_check
    _
  $region23: #{concat_resnet_forward.1} parent=0 // pred_check_branch
    %25 = sbr.rel (0) target = $region25
  $region24: #{concat_resnet_forward.1} parent=0 // pred_region
    _
  $region25: #{concat_resnet_forward.1} parent=0 // pred_fallthru
    _
  // Predicated region
  $region26: #{concat_resnet_forward.1} parent=0 // pred_check
    _
  $region27: #{concat_resnet_forward.1} parent=0 // pred_check_branch
    %27 = sbr.rel (0) target = $region29
  $region28: #{concat_resnet_forward.1} parent=0 // pred_region
    _
  $region29: #{concat_resnet_forward.1} parent=0 // pred_fallthru
    _
  // Predicated region
  $region30: #{concat_resnet_forward.1} parent=0 // pred_check
    _
  $region31: #{concat_resnet_forward.1} parent=0 // pred_check_branch
    %29 = sbr.rel (0) target = $region33
  $region32: #{concat_resnet_forward.1} parent=0 // pred_region
    _
  $region33: #{concat_resnet_forward.1} parent=0 // pred_fallthru
    _
  // Predicated region
  $region34: #{concat_resnet_forward.1} parent=0 // pred_check
    _
  $region35: #{concat_resnet_forward.1} parent=0 // pred_check_branch
    %31 = sbr.rel (0) target = $region37
  $region36: #{concat_resnet_forward.1} parent=0 // pred_region
    _
  $region37: #{concat_resnet_forward.1} parent=0 // pred_fallthru
    _
  %v33 = vld [vmem:[%s0] sm:$0xff]
  %v34 = vld [vmem:[%s1] sm:$0xf]
  %v35 = vld [vmem:[%s1 + $0x4] sm:$0xf]
  %v36 = vld [vmem:[%s1 + $0x8] sm:$0xf]
  %v37 = vld [vmem:[%s1 + $0xc] sm:$0xf]
  %v38 = vld [vmem:[%s1 + $0x10] sm:$0xf]
  %v39 = vld [vmem:[%s1 + $0x14] sm:$0xf]
  %v40 = vld [vmem:[%s1 + $0x18] sm:$0xf]
  %v41 = vld [vmem:[%s1 + $0x1c] sm:$0xf]
  %v42 = vld [vmem:[%s2] sm:$0xff]
  %v43 = vld [vmem:[%s2 + $0x8] sm:$0xff]
  %v44 = vld [vmem:[%s2 + $0x10] sm:$0xff]
  %v45 = vld [vmem:[%s2 + $0x18] sm:$0xff]
  %v46 = vld [vmem:[%s2 + $0x20] sm:$0xff]
  %v47 = vld [vmem:[%s2 + $0x28] sm:$0xff]
  %v48 = vld [vmem:[%s2 + $0x30] sm:$0xff]
  %v49 = vld [vmem:[%s2 + $0x38] sm:$0xff]
  %51 = vset.pattern.permute.xlu0 0
  %52 = vperm.xlu0 %51, %v42
  %v53 = vpop.permute.xlu0 %52
  %56 = vset.pattern.permute.xlu0 0
  %57 = vperm.xlu0 %56, %v43
  %v58 = vpop.permute.xlu0 %57
  %61 = vset.pattern.permute.xlu0 0
  %62 = vperm.xlu0 %61, %v44
  %v63 = vpop.permute.xlu0 %62
  %66 = vset.pattern.permute.xlu0 0
  %67 = vperm.xlu0 %66, %v45
  %v68 = vpop.permute.xlu0 %67
  %71 = vset.pattern.permute.xlu0 0
  %72 = vperm.xlu0 %71, %v46
  %v73 = vpop.permute.xlu0 %72
  %76 = vset.pattern.permute.xlu0 0
  %77 = vperm.xlu0 %76, %v47
  %v78 = vpop.permute.xlu0 %77
  %81 = vset.pattern.permute.xlu0 0
  %82 = vperm.xlu0 %81, %v48
  %v83 = vpop.permute.xlu0 %82
  %86 = vset.pattern.permute.xlu0 0
  %87 = vperm.xlu0 %86, %v49
  %v88 = vpop.permute.xlu0 %87
  %v98 = vunpack.c.l.b16 %v34
  %v99 = vunpack.c.l.b16 %v35
  %v100 = vunpack.c.l.b16 %v36
  %v101 = vunpack.c.l.b16 %v37
  %v102 = vunpack.c.l.b16 %v38
  %v103 = vunpack.c.l.b16 %v39
  %v104 = vunpack.c.l.b16 %v40
  %v105 = vunpack.c.l.b16 %v41
  %v106 = vpack.c.b16 %v99, %v98
  %v107 = vpack.c.b16 %v101, %v100
  %v108 = vpack.c.b16 %v103, %v102
  %v109 = vpack.c.b16 %v105, %v104
  %v111 = vcombine.high %v33, %v33
  %v113 = vunpack.c.l.s4 1983009808
  %v114 = vunpack.c.0.s8 %v113
  %v115 = vlaneseq
  %v116 = vshrl.u32 %v115, 7
  %v117 = vsub.s32 %v114, %v116
  %v118 = vrot.slane %v33, %v117
  %v120 = vunpack.c.l.s4 1983009808
  %v121 = vunpack.c.0.s8 %v120
  %v122 = vlaneseq
  %v123 = vshrl.u32 %v122, 7
  %v124 = vsub.s32 %v121, %v123
  %v125 = vrot.slane %v111, %v124
  %v126 = vcombine.high %v118, %v118
  %v127 = vcombine.high %v125, %v125
  %vm128 = vcmask 31744
  %v130 = vsel %vm128, %v106, 0
  %v133 = vsel %vm128, %v107, 0
  %v136 = vsel %vm128, %v108, 0
  %v139 = vsel %vm128, %v109, 0
  %vm141 = vcmask 1041408
  %v143 = vsel %vm141, %v118, 0
  %v146 = vsel %vm141, %v126, 0
  %v149 = vsel %vm141, %v125, 0
  %v152 = vsel %vm141, %v127, 0
  %154 = vmatprep.subr.bf16.mxu0 %v146
  %155 = vmatpush1.bf16.msra.mxu0 %v143
  %156 = vmatprep.subr.bf16.mxu0 0
  %157 = vmatpush1.bf16.msra.mxu0 0
  %158 = vmatprep.subr.bf16.mxu0 0
  %159 = vmatpush1.bf16.msra.mxu0 0
  %160 = vmatprep.subr.bf16.mxu0 0
  %161 = vmatpush1.bf16.msra.mxu0 0
  %162 = vmatprep.subr.bf16.mxu0 0
  %163 = vmatpush1.bf16.msra.mxu0 0
  %164 = vmatprep.subr.bf16.mxu0 0
  %165 = vmatpush1.bf16.msra.mxu0 0
  %166 = vmatprep.subr.bf16.mxu0 0
  %167 = vmatpush1.bf16.msra.mxu0 0
  %168 = vmatprep.subr.bf16.mxu0 0
  %169 = vmatpush1.bf16.msra.mxu0 0
  %170 = vmatprep.subr.bf16.mxu0 0
  %171 = vmatpush1.bf16.msra.mxu0 0
  %172 = vmatprep.subr.bf16.mxu0 0
  %173 = vmatpush1.bf16.msra.mxu0 0
  %174 = vmatprep.subr.bf16.mxu0 0
  %175 = vmatpush1.bf16.msra.mxu0 0
  %176 = vmatprep.subr.bf16.mxu0 0
  %177 = vmatpush1.bf16.msra.mxu0 0
  %178 = vmatprep.subr.bf16.mxu0 0
  %179 = vmatpush1.bf16.msra.mxu0 0
  %180 = vmatprep.subr.bf16.mxu0 0
  %181 = vmatpush1.bf16.msra.mxu0 0
  %182 = vmatprep.subr.bf16.mxu0 0
  %183 = vmatpush1.bf16.msra.mxu0 0
  %184 = vmatprep.subr.bf16.mxu0 0
  %185 = vmatpush1.bf16.msra.mxu0 0
  %186 = vmatprep.mubr.bf16.mxu0 0
  %187 = vmatmul.mubr.bf16.gmra.mrb[0].mxu0 %v130
  %v188 = vpop.f32.mrb[0].mxu0
  %v189 = vadd.f32 %v53, %v188
  %v190 = vpop.f32.mrb[0].mxu0
  %v191 = vadd.f32 %v53, %v190
  %v192 = vpop.f32.mrb[0].mxu0
  %v193 = vadd.f32 %v58, %v192
  %v194 = vpop.f32.mrb[0].mxu0
  %v195 = vadd.f32 %v58, %v194
  %196 = vmatprep.mubr.bf16.mxu0 0
  %197 = vmatmul.mubr.bf16.gmra.mrb[0].mxu0 %v133
  %v198 = vpop.f32.mrb[0].mxu0
  %v199 = vadd.f32 %v63, %v198
  %v200 = vpop.f32.mrb[0].mxu0
  %v201 = vadd.f32 %v63, %v200
  %v202 = vpop.f32.mrb[0].mxu0
  %v203 = vadd.f32 %v68, %v202
  %v204 = vpop.f32.mrb[0].mxu0
  %v205 = vadd.f32 %v68, %v204
  %206 = vmatprep.mubr.bf16.mxu0 0
  %207 = vmatmul.mubr.bf16.gmra.mrb[0].mxu0 %v136
  %v208 = vpop.f32.mrb[0].mxu0
  %v209 = vadd.f32 %v73, %v208
  %v210 = vpop.f32.mrb[0].mxu0
  %v211 = vadd.f32 %v73, %v210
  %v212 = vpop.f32.mrb[0].mxu0
  %v213 = vadd.f32 %v78, %v212
  %v214 = vpop.f32.mrb[0].mxu0
  %v215 = vadd.f32 %v78, %v214
  %216 = vmatprep.mubr.bf16.mxu0 0
  %217 = vmatmul.mubr.bf16.gmra.mrb[0].mxu0 %v139
  %v218 = vpop.f32.mrb[0].mxu0
  %v219 = vadd.f32 %v83, %v218
  %v220 = vpop.f32.mrb[0].mxu0
  %v221 = vadd.f32 %v83, %v220
  %v222 = vpop.f32.mrb[0].mxu0
  %v223 = vadd.f32 %v88, %v222
  %v224 = vpop.f32.mrb[0].mxu0
  %v225 = vadd.f32 %v88, %v224
  %226 = vdwg.mxu0
  %227 = vmatprep.subr.bf16.mxu0 %v152
  %228 = vmatpush1.bf16.msra.mxu0 %v149
  %229 = vmatprep.subr.bf16.mxu0 0
  %230 = vmatpush1.bf16.msra.mxu0 0
  %231 = vmatprep.subr.bf16.mxu0 0
  %232 = vmatpush1.bf16.msra.mxu0 0
  %233 = vmatprep.subr.bf16.mxu0 0
  %234 = vmatpush1.bf16.msra.mxu0 0
  %235 = vmatprep.subr.bf16.mxu0 0
  %236 = vmatpush1.bf16.msra.mxu0 0
  %237 = vmatprep.subr.bf16.mxu0 0
  %238 = vmatpush1.bf16.msra.mxu0 0
  %239 = vmatprep.subr.bf16.mxu0 0
  %240 = vmatpush1.bf16.msra.mxu0 0
  %241 = vmatprep.subr.bf16.mxu0 0
  %242 = vmatpush1.bf16.msra.mxu0 0
  %243 = vmatprep.subr.bf16.mxu0 0
  %244 = vmatpush1.bf16.msra.mxu0 0
  %245 = vmatprep.subr.bf16.mxu0 0
  %246 = vmatpush1.bf16.msra.mxu0 0
  %247 = vmatprep.subr.bf16.mxu0 0
  %248 = vmatpush1.bf16.msra.mxu0 0
  %249 = vmatprep.subr.bf16.mxu0 0
  %250 = vmatpush1.bf16.msra.mxu0 0
  %251 = vmatprep.subr.bf16.mxu0 0
  %252 = vmatpush1.bf16.msra.mxu0 0
  %253 = vmatprep.subr.bf16.mxu0 0
  %254 = vmatpush1.bf16.msra.mxu0 0
  %255 = vmatprep.subr.bf16.mxu0 0
  %256 = vmatpush1.bf16.msra.mxu0 0
  %257 = vmatprep.subr.bf16.mxu0 0
  %258 = vmatpush1.bf16.msra.mxu0 0
  %259 = vmatprep.mubr.bf16.mxu0 0
  %260 = vmatmul.mubr.bf16.gmra.mrb[0].mxu0 %v130
  %v261 = vpop.f32.mrb[0].mxu0
  %v262 = vadd.f32 %v53, %v261
  %v263 = vpop.f32.mrb[0].mxu0
  %v264 = vadd.f32 %v53, %v263
  %v265 = vpop.f32.mrb[0].mxu0
  %v266 = vadd.f32 %v58, %v265
  %v267 = vpop.f32.mrb[0].mxu0
  %v268 = vadd.f32 %v58, %v267
  %269 = vmatprep.mubr.bf16.mxu0 0
  %270 = vmatmul.mubr.bf16.gmra.mrb[0].mxu0 %v133
  %v271 = vpop.f32.mrb[0].mxu0
  %v272 = vadd.f32 %v63, %v271
  %v273 = vpop.f32.mrb[0].mxu0
  %v274 = vadd.f32 %v63, %v273
  %v275 = vpop.f32.mrb[0].mxu0
  %v276 = vadd.f32 %v68, %v275
  %v277 = vpop.f32.mrb[0].mxu0
  %v278 = vadd.f32 %v68, %v277
  %279 = vmatprep.mubr.bf16.mxu0 0
  %280 = vmatmul.mubr.bf16.gmra.mrb[0].mxu0 %v136
  %v281 = vpop.f32.mrb[0].mxu0
  %v282 = vadd.f32 %v73, %v281
  %v283 = vpop.f32.mrb[0].mxu0
  %v284 = vadd.f32 %v73, %v283
  %v285 = vpop.f32.mrb[0].mxu0
  %v286 = vadd.f32 %v78, %v285
  %v287 = vpop.f32.mrb[0].mxu0
  %v288 = vadd.f32 %v78, %v287
  %289 = vmatprep.mubr.bf16.mxu0 0
  %290 = vmatmul.mubr.bf16.gmra.mrb[0].mxu0 %v139
  %v291 = vpop.f32.mrb[0].mxu0
  %v292 = vadd.f32 %v83, %v291
  %v293 = vpop.f32.mrb[0].mxu0
  %v294 = vadd.f32 %v83, %v293
  %v295 = vpop.f32.mrb[0].mxu0
  %v296 = vadd.f32 %v88, %v295
  %v297 = vpop.f32.mrb[0].mxu0
  %v298 = vadd.f32 %v88, %v297
  %299 = vdwg.mxu0
  %v300 = vmax.f32 %v189, 0.0
  %v301 = vmax.f32 %v191, 0.0
  %v302 = vmax.f32 %v262, 0.0
  %v303 = vmax.f32 %v264, 0.0
  %v304 = vmax.f32 %v193, 0.0
  %v305 = vmax.f32 %v195, 0.0
  %v306 = vmax.f32 %v266, 0.0
  %v307 = vmax.f32 %v268, 0.0
  %v308 = vmax.f32 %v199, 0.0
  %v309 = vmax.f32 %v201, 0.0
  %v310 = vmax.f32 %v272, 0.0
  %v311 = vmax.f32 %v274, 0.0
  %v312 = vmax.f32 %v203, 0.0
  %v313 = vmax.f32 %v205, 0.0
  %v314 = vmax.f32 %v276, 0.0
  %v315 = vmax.f32 %v278, 0.0
  %v316 = vmax.f32 %v209, 0.0
  %v317 = vmax.f32 %v211, 0.0
  %v318 = vmax.f32 %v282, 0.0
  %v319 = vmax.f32 %v284, 0.0
  %v320 = vmax.f32 %v213, 0.0
  %v321 = vmax.f32 %v215, 0.0
  %v322 = vmax.f32 %v286, 0.0
  %v323 = vmax.f32 %v288, 0.0
  %v324 = vmax.f32 %v219, 0.0
  %v325 = vmax.f32 %v221, 0.0
  %v326 = vmax.f32 %v292, 0.0
  %v327 = vmax.f32 %v294, 0.0
  %v328 = vmax.f32 %v223, 0.0
  %v329 = vmax.f32 %v225, 0.0
  %v330 = vmax.f32 %v296, 0.0
  %v331 = vmax.f32 %v298, 0.0
  %v332 = vpack.c.bf16 %v304, %v300
  %v333 = vpack.c.bf16 %v305, %v301
  %v334 = vpack.c.bf16 %v306, %v302
  %v335 = vpack.c.bf16 %v307, %v303
  %v336 = vpack.c.bf16 %v312, %v308
  %v337 = vpack.c.bf16 %v313, %v309
  %v338 = vpack.c.bf16 %v314, %v310
  %v339 = vpack.c.bf16 %v315, %v311
  %v340 = vpack.c.bf16 %v320, %v316
  %v341 = vpack.c.bf16 %v321, %v317
  %v342 = vpack.c.bf16 %v322, %v318
  %v343 = vpack.c.bf16 %v323, %v319
  %v344 = vpack.c.bf16 %v328, %v324
  %v345 = vpack.c.bf16 %v329, %v325
  %v346 = vpack.c.bf16 %v330, %v326
  %v347 = vpack.c.bf16 %v331, %v327
  %v348 = vld [vmem:[%s3] sm:$0xf]
  %v349 = vld [vmem:[%s3 + $0x4] sm:$0xf]
  %v350 = vld [vmem:[%s3 + $0x8] sm:$0xf]
  %v351 = vld [vmem:[%s3 + $0xc] sm:$0xf]
  %v352 = vld [vmem:[%s3 + $0x10] sm:$0xf]
  %v353 = vld [vmem:[%s3 + $0x14] sm:$0xf]
  %v354 = vld [vmem:[%s3 + $0x18] sm:$0xf]
  %v355 = vld [vmem:[%s3 + $0x1c] sm:$0xf]
  %v356 = vld [vmem:[%s4] sm:$0xff]
  %v357 = vld [vmem:[%s4 + $0x8] sm:$0xff]
  %v358 = vld [vmem:[%s4 + $0x10] sm:$0xff]
  %v359 = vld [vmem:[%s4 + $0x18] sm:$0xff]
  %v360 = vld [vmem:[%s4 + $0x20] sm:$0xff]
  %v361 = vld [vmem:[%s4 + $0x28] sm:$0xff]
  %v362 = vld [vmem:[%s4 + $0x30] sm:$0xff]
  %v363 = vld [vmem:[%s4 + $0x38] sm:$0xff]
  %365 = vset.pattern.permute.xlu0 0
  %366 = vperm.xlu0 %365, %v356
  %v367 = vpop.permute.xlu0 %366
  %370 = vset.pattern.permute.xlu0 0
  %371 = vperm.xlu0 %370, %v357
  %v372 = vpop.permute.xlu0 %371
  %375 = vset.pattern.permute.xlu0 0
  %376 = vperm.xlu0 %375, %v358
  %v377 = vpop.permute.xlu0 %376
  %380 = vset.pattern.permute.xlu0 0
  %381 = vperm.xlu0 %380, %v359
  %v382 = vpop.permute.xlu0 %381
  %385 = vset.pattern.permute.xlu0 0
  %386 = vperm.xlu0 %385, %v360
  %v387 = vpop.permute.xlu0 %386
  %390 = vset.pattern.permute.xlu0 0
  %391 = vperm.xlu0 %390, %v361
  %v392 = vpop.permute.xlu0 %391
  %395 = vset.pattern.permute.xlu0 0
  %396 = vperm.xlu0 %395, %v362
  %v397 = vpop.permute.xlu0 %396
  %400 = vset.pattern.permute.xlu0 0
  %401 = vperm.xlu0 %400, %v363
  %v402 = vpop.permute.xlu0 %401
  %v412 = vunpack.c.l.b16 %v348
  %v413 = vunpack.c.l.b16 %v349
  %v414 = vunpack.c.l.b16 %v350
  %v415 = vunpack.c.l.b16 %v351
  %v416 = vunpack.c.l.b16 %v352
  %v417 = vunpack.c.l.b16 %v353
  %v418 = vunpack.c.l.b16 %v354
  %v419 = vunpack.c.l.b16 %v355
  %v420 = vpack.c.b16 %v413, %v412
  %v421 = vpack.c.b16 %v415, %v414
  %v422 = vpack.c.b16 %v417, %v416
  %v423 = vpack.c.b16 %v419, %v418
  %vm424 = vcmask 523264
  %v426 = vsel %vm424, %v420, 0
  %v429 = vsel %vm424, %v421, 0
  %v432 = vsel %vm424, %v422, 0
  %v435 = vsel %vm424, %v423, 0
  %437 = vmatprep.subr.bf16.mxu0 %v333
  %438 = vmatpush1.bf16.msra.mxu0 %v332
  %439 = vmatprep.subr.bf16.mxu0 %v337
  %440 = vmatpush1.bf16.msra.mxu0 %v336
  %441 = vmatprep.subr.bf16.mxu0 %v341
  %442 = vmatpush1.bf16.msra.mxu0 %v340
  %443 = vmatprep.subr.bf16.mxu0 %v345
  %444 = vmatpush1.bf16.msra.mxu0 %v344
  %445 = vmatprep.subr.bf16.mxu0 0
  %446 = vmatpush1.bf16.msra.mxu0 0
  %447 = vmatprep.subr.bf16.mxu0 0
  %448 = vmatpush1.bf16.msra.mxu0 0
  %449 = vmatprep.subr.bf16.mxu0 0
  %450 = vmatpush1.bf16.msra.mxu0 0
  %451 = vmatprep.subr.bf16.mxu0 0
  %452 = vmatpush1.bf16.msra.mxu0 0
  %453 = vmatprep.subr.bf16.mxu0 0
  %454 = vmatpush1.bf16.msra.mxu0 0
  %455 = vmatprep.subr.bf16.mxu0 0
  %456 = vmatpush1.bf16.msra.mxu0 0
  %457 = vmatprep.subr.bf16.mxu0 0
  %458 = vmatpush1.bf16.msra.mxu0 0
  %459 = vmatprep.subr.bf16.mxu0 0
  %460 = vmatpush1.bf16.msra.mxu0 0
  %461 = vmatprep.subr.bf16.mxu0 0
  %462 = vmatpush1.bf16.msra.mxu0 0
  %463 = vmatprep.subr.bf16.mxu0 0
  %464 = vmatpush1.bf16.msra.mxu0 0
  %465 = vmatprep.subr.bf16.mxu0 0
  %466 = vmatpush1.bf16.msra.mxu0 0
  %467 = vmatprep.subr.bf16.mxu0 0
  %468 = vmatpush1.bf16.msra.mxu0 0
  %469 = vmatprep.mubr.bf16.mxu0 0
  %470 = vmatmul.mubr.bf16.gmra.mrb[0].mxu0 %v426
  %v471 = vpop.f32.mrb[0].mxu0
  %v472 = vadd.f32 %v367, %v471
  %v473 = vpop.f32.mrb[0].mxu0
  %v474 = vadd.f32 %v367, %v473
  %v475 = vpop.f32.mrb[0].mxu0
  %v476 = vadd.f32 %v372, %v475
  %v477 = vpop.f32.mrb[0].mxu0
  %v478 = vadd.f32 %v372, %v477
  %479 = vmatprep.mubr.bf16.mxu0 0
  %480 = vmatmul.mubr.bf16.gmra.mrb[0].mxu0 %v429
  %v481 = vpop.f32.mrb[0].mxu0
  %v482 = vadd.f32 %v377, %v481
  %v483 = vpop.f32.mrb[0].mxu0
  %v484 = vadd.f32 %v377, %v483
  %v485 = vpop.f32.mrb[0].mxu0
  %v486 = vadd.f32 %v382, %v485
  %v487 = vpop.f32.mrb[0].mxu0
  %v488 = vadd.f32 %v382, %v487
  %489 = vmatprep.mubr.bf16.mxu0 0
  %490 = vmatmul.mubr.bf16.gmra.mrb[0].mxu0 %v432
  %v491 = vpop.f32.mrb[0].mxu0
  %v492 = vadd.f32 %v387, %v491
  %v493 = vpop.f32.mrb[0].mxu0
  %v494 = vadd.f32 %v387, %v493
  %v495 = vpop.f32.mrb[0].mxu0
  %v496 = vadd.f32 %v392, %v495
  %v497 = vpop.f32.mrb[0].mxu0
  %v498 = vadd.f32 %v392, %v497
  %499 = vmatprep.mubr.bf16.mxu0 0
  %500 = vmatmul.mubr.bf16.gmra.mrb[0].mxu0 %v435
  %v501 = vpop.f32.mrb[0].mxu0
  %v502 = vadd.f32 %v397, %v501
  %v503 = vpop.f32.mrb[0].mxu0
  %v504 = vadd.f32 %v397, %v503
  %v505 = vpop.f32.mrb[0].mxu0
  %v506 = vadd.f32 %v402, %v505
  %v507 = vpop.f32.mrb[0].mxu0
  %v508 = vadd.f32 %v402, %v507
  %509 = vdwg.mxu0
  %510 = vmatprep.subr.bf16.mxu0 %v335
  %511 = vmatpush1.bf16.msra.mxu0 %v334
  %512 = vmatprep.subr.bf16.mxu0 %v339
  %513 = vmatpush1.bf16.msra.mxu0 %v338
  %514 = vmatprep.subr.bf16.mxu0 %v343
  %515 = vmatpush1.bf16.msra.mxu0 %v342
  %516 = vmatprep.subr.bf16.mxu0 %v347
  %517 = vmatpush1.bf16.msra.mxu0 %v346
  %518 = vmatprep.subr.bf16.mxu0 0
  %519 = vmatpush1.bf16.msra.mxu0 0
  %520 = vmatprep.subr.bf16.mxu0 0
  %521 = vmatpush1.bf16.msra.mxu0 0
  %522 = vmatprep.subr.bf16.mxu0 0
  %523 = vmatpush1.bf16.msra.mxu0 0
  %524 = vmatprep.subr.bf16.mxu0 0
  %525 = vmatpush1.bf16.msra.mxu0 0
  %526 = vmatprep.subr.bf16.mxu0 0
  %527 = vmatpush1.bf16.msra.mxu0 0
  %528 = vmatprep.subr.bf16.mxu0 0
  %529 = vmatpush1.bf16.msra.mxu0 0
  %530 = vmatprep.subr.bf16.mxu0 0
  %531 = vmatpush1.bf16.msra.mxu0 0
  %532 = vmatprep.subr.bf16.mxu0 0
  %533 = vmatpush1.bf16.msra.mxu0 0
  %534 = vmatprep.subr.bf16.mxu0 0
  %535 = vmatpush1.bf16.msra.mxu0 0
  %536 = vmatprep.subr.bf16.mxu0 0
  %537 = vmatpush1.bf16.msra.mxu0 0
  %538 = vmatprep.subr.bf16.mxu0 0
  %539 = vmatpush1.bf16.msra.mxu0 0
  %540 = vmatprep.subr.bf16.mxu0 0
  %541 = vmatpush1.bf16.msra.mxu0 0
  %542 = vmatprep.mubr.bf16.mxu0 0
  %543 = vmatmul.mubr.bf16.gmra.mrb[0].mxu0 %v426
  %v544 = vpop.f32.mrb[0].mxu0
  %v545 = vadd.f32 %v367, %v544
  %v546 = vpop.f32.mrb[0].mxu0
  %v547 = vadd.f32 %v367, %v546
  %v548 = vpop.f32.mrb[0].mxu0
  %v549 = vadd.f32 %v372, %v548
  %v550 = vpop.f32.mrb[0].mxu0
  %v551 = vadd.f32 %v372, %v550
  %552 = vmatprep.mubr.bf16.mxu0 0
  %553 = vmatmul.mubr.bf16.gmra.mrb[0].mxu0 %v429
  %v554 = vpop.f32.mrb[0].mxu0
  %v555 = vadd.f32 %v377, %v554
  %v556 = vpop.f32.mrb[0].mxu0
  %v557 = vadd.f32 %v377, %v556
  %v558 = vpop.f32.mrb[0].mxu0
  %v559 = vadd.f32 %v382, %v558
  %v560 = vpop.f32.mrb[0].mxu0
  %v561 = vadd.f32 %v382, %v560
  %562 = vmatprep.mubr.bf16.mxu0 0
  %563 = vmatmul.mubr.bf16.gmra.mrb[0].mxu0 %v432
  %v564 = vpop.f32.mrb[0].mxu0
  %v565 = vadd.f32 %v387, %v564
  %v566 = vpop.f32.mrb[0].mxu0
  %v567 = vadd.f32 %v387, %v566
  %v568 = vpop.f32.mrb[0].mxu0
  %v569 = vadd.f32 %v392, %v568
  %v570 = vpop.f32.mrb[0].mxu0
  %v571 = vadd.f32 %v392, %v570
  %572 = vmatprep.mubr.bf16.mxu0 0
  %573 = vmatmul.mubr.bf16.gmra.mrb[0].mxu0 %v435
  %v574 = vpop.f32.mrb[0].mxu0
  %v575 = vadd.f32 %v397, %v574
  %v576 = vpop.f32.mrb[0].mxu0
  %v577 = vadd.f32 %v397, %v576
  %v578 = vpop.f32.mrb[0].mxu0
  %v579 = vadd.f32 %v402, %v578
  %v580 = vpop.f32.mrb[0].mxu0
  %v581 = vadd.f32 %v402, %v580
  %582 = vdwg.mxu0
  %v583 = vmax.f32 %v472, 0.0
  %v584 = vmax.f32 %v474, 0.0
  %v585 = vmax.f32 %v545, 0.0
  %v586 = vmax.f32 %v547, 0.0
  %v587 = vmax.f32 %v476, 0.0
  %v588 = vmax.f32 %v478, 0.0
  %v589 = vmax.f32 %v549, 0.0
  %v590 = vmax.f32 %v551, 0.0
  %v591 = vmax.f32 %v482, 0.0
  %v592 = vmax.f32 %v484, 0.0
  %v593 = vmax.f32 %v555, 0.0
  %v594 = vmax.f32 %v557, 0.0
  %v595 = vmax.f32 %v486, 0.0
  %v596 = vmax.f32 %v488, 0.0
  %v597 = vmax.f32 %v559, 0.0
  %v598 = vmax.f32 %v561, 0.0
  %v599 = vmax.f32 %v492, 0.0
  %v600 = vmax.f32 %v494, 0.0
  %v601 = vmax.f32 %v565, 0.0
  %v602 = vmax.f32 %v567, 0.0
  %v603 = vmax.f32 %v496, 0.0
  %v604 = vmax.f32 %v498, 0.0
  %v605 = vmax.f32 %v569, 0.0
  %v606 = vmax.f32 %v571, 0.0
  %v607 = vmax.f32 %v502, 0.0
  %v608 = vmax.f32 %v504, 0.0
  %v609 = vmax.f32 %v575, 0.0
  %v610 = vmax.f32 %v577, 0.0
  %v611 = vmax.f32 %v506, 0.0
  %v612 = vmax.f32 %v508, 0.0
  %v613 = vmax.f32 %v579, 0.0
  %v614 = vmax.f32 %v581, 0.0
  %v615 = vld [vmem:[%s5] sm:$0xf]
  %v616 = vld [vmem:[%s5 + $0x4] sm:$0xf]
  %v617 = vld [vmem:[%s5 + $0x8] sm:$0xf]
  %v618 = vld [vmem:[%s5 + $0xc] sm:$0xf]
  %v619 = vld [vmem:[%s5 + $0x10] sm:$0xf]
  %v620 = vld [vmem:[%s5 + $0x14] sm:$0xf]
  %v621 = vld [vmem:[%s5 + $0x18] sm:$0xf]
  %v622 = vld [vmem:[%s5 + $0x1c] sm:$0xf]
  %v623 = vpack.c.bf16 %v587, %v583
  %v624 = vpack.c.bf16 %v588, %v584
  %v625 = vpack.c.bf16 %v589, %v585
  %v626 = vpack.c.bf16 %v590, %v586
  %v627 = vpack.c.bf16 %v595, %v591
  %v628 = vpack.c.bf16 %v596, %v592
  %v629 = vpack.c.bf16 %v597, %v593
  %v630 = vpack.c.bf16 %v598, %v594
  %v631 = vpack.c.bf16 %v603, %v599
  %v632 = vpack.c.bf16 %v604, %v600
  %v633 = vpack.c.bf16 %v605, %v601
  %v634 = vpack.c.bf16 %v606, %v602
  %v635 = vpack.c.bf16 %v611, %v607
  %v636 = vpack.c.bf16 %v612, %v608
  %v637 = vpack.c.bf16 %v613, %v609
  %v638 = vpack.c.bf16 %v614, %v610
  %v639 = vld [vmem:[%s6] sm:$0xff]
  %v640 = vld [vmem:[%s6 + $0x8] sm:$0xff]
  %v641 = vld [vmem:[%s6 + $0x10] sm:$0xff]
  %v642 = vld [vmem:[%s6 + $0x18] sm:$0xff]
  %v643 = vld [vmem:[%s6 + $0x20] sm:$0xff]
  %v644 = vld [vmem:[%s6 + $0x28] sm:$0xff]
  %v645 = vld [vmem:[%s6 + $0x30] sm:$0xff]
  %v646 = vld [vmem:[%s6 + $0x38] sm:$0xff]
  %648 = vset.pattern.permute.xlu0 0
  %649 = vperm.xlu0 %648, %v639
  %v650 = vpop.permute.xlu0 %649
  %653 = vset.pattern.permute.xlu0 0
  %654 = vperm.xlu0 %653, %v640
  %v655 = vpop.permute.xlu0 %654
  %658 = vset.pattern.permute.xlu0 0
  %659 = vperm.xlu0 %658, %v641
  %v660 = vpop.permute.xlu0 %659
  %663 = vset.pattern.permute.xlu0 0
  %664 = vperm.xlu0 %663, %v642
  %v665 = vpop.permute.xlu0 %664
  %668 = vset.pattern.permute.xlu0 0
  %669 = vperm.xlu0 %668, %v643
  %v670 = vpop.permute.xlu0 %669
  %673 = vset.pattern.permute.xlu0 0
  %674 = vperm.xlu0 %673, %v644
  %v675 = vpop.permute.xlu0 %674
  %678 = vset.pattern.permute.xlu0 0
  %679 = vperm.xlu0 %678, %v645
  %v680 = vpop.permute.xlu0 %679
  %683 = vset.pattern.permute.xlu0 0
  %684 = vperm.xlu0 %683, %v646
  %v685 = vpop.permute.xlu0 %684
  %v695 = vunpack.c.l.b16 %v615
  %v696 = vunpack.c.l.b16 %v616
  %v697 = vunpack.c.l.b16 %v617
  %v698 = vunpack.c.l.b16 %v618
  %v699 = vunpack.c.l.b16 %v619
  %v700 = vunpack.c.l.b16 %v620
  %v701 = vunpack.c.l.b16 %v621
  %v702 = vunpack.c.l.b16 %v622
  %v703 = vpack.c.b16 %v696, %v695
  %v704 = vpack.c.b16 %v698, %v697
  %v705 = vpack.c.b16 %v700, %v699
  %v706 = vpack.c.b16 %v702, %v701
  %v708 = vsel %vm424, %v703, 0
  %v711 = vsel %vm424, %v704, 0
  %v714 = vsel %vm424, %v705, 0
  %v717 = vsel %vm424, %v706, 0
  %719 = vmatprep.subr.bf16.mxu0 %v624
  %720 = vmatpush1.bf16.msra.mxu0 %v623
  %721 = vmatprep.subr.bf16.mxu0 %v628
  %722 = vmatpush1.bf16.msra.mxu0 %v627
  %723 = vmatprep.subr.bf16.mxu0 %v632
  %724 = vmatpush1.bf16.msra.mxu0 %v631
  %725 = vmatprep.subr.bf16.mxu0 %v636
  %726 = vmatpush1.bf16.msra.mxu0 %v635
  %727 = vmatprep.subr.bf16.mxu0 0
  %728 = vmatpush1.bf16.msra.mxu0 0
  %729 = vmatprep.subr.bf16.mxu0 0
  %730 = vmatpush1.bf16.msra.mxu0 0
  %731 = vmatprep.subr.bf16.mxu0 0
  %732 = vmatpush1.bf16.msra.mxu0 0
  %733 = vmatprep.subr.bf16.mxu0 0
  %734 = vmatpush1.bf16.msra.mxu0 0
  %735 = vmatprep.subr.bf16.mxu0 0
  %736 = vmatpush1.bf16.msra.mxu0 0
  %737 = vmatprep.subr.bf16.mxu0 0
  %738 = vmatpush1.bf16.msra.mxu0 0
  %739 = vmatprep.subr.bf16.mxu0 0
  %740 = vmatpush1.bf16.msra.mxu0 0
  %741 = vmatprep.subr.bf16.mxu0 0
  %742 = vmatpush1.bf16.msra.mxu0 0
  %743 = vmatprep.subr.bf16.mxu0 0
  %744 = vmatpush1.bf16.msra.mxu0 0
  %745 = vmatprep.subr.bf16.mxu0 0
  %746 = vmatpush1.bf16.msra.mxu0 0
  %747 = vmatprep.subr.bf16.mxu0 0
  %748 = vmatpush1.bf16.msra.mxu0 0
  %749 = vmatprep.subr.bf16.mxu0 0
  %750 = vmatpush1.bf16.msra.mxu0 0
  %751 = vmatprep.mubr.bf16.mxu0 0
  %752 = vmatmul.mubr.bf16.gmra.mrb[0].mxu0 %v708
  %v753 = vpop.f32.mrb[0].mxu0
  %v754 = vadd.f32 %v650, %v753
  %v755 = vpop.f32.mrb[0].mxu0
  %v756 = vadd.f32 %v650, %v755
  %v757 = vpop.f32.mrb[0].mxu0
  %v758 = vadd.f32 %v655, %v757
  %v759 = vpop.f32.mrb[0].mxu0
  %v760 = vadd.f32 %v655, %v759
  %761 = vmatprep.mubr.bf16.mxu0 0
  %762 = vmatmul.mubr.bf16.gmra.mrb[0].mxu0 %v711
  %v763 = vpop.f32.mrb[0].mxu0
  %v764 = vadd.f32 %v660, %v763
  %v765 = vpop.f32.mrb[0].mxu0
  %v766 = vadd.f32 %v660, %v765
  %v767 = vpop.f32.mrb[0].mxu0
  %v768 = vadd.f32 %v665, %v767
  %v769 = vpop.f32.mrb[0].mxu0
  %v770 = vadd.f32 %v665, %v769
  %771 = vmatprep.mubr.bf16.mxu0 0
  %772 = vmatmul.mubr.bf16.gmra.mrb[0].mxu0 %v714
  %v773 = vpop.f32.mrb[0].mxu0
  %v774 = vadd.f32 %v670, %v773
  %v775 = vpop.f32.mrb[0].mxu0
  %v776 = vadd.f32 %v670, %v775
  %v777 = vpop.f32.mrb[0].mxu0
  %v778 = vadd.f32 %v675, %v777
  %v779 = vpop.f32.mrb[0].mxu0
  %v780 = vadd.f32 %v675, %v779
  %781 = vmatprep.mubr.bf16.mxu0 0
  %782 = vmatmul.mubr.bf16.gmra.mrb[0].mxu0 %v717
  %v783 = vpop.f32.mrb[0].mxu0
  %v784 = vadd.f32 %v680, %v783
  %v785 = vpop.f32.mrb[0].mxu0
  %v786 = vadd.f32 %v680, %v785
  %v787 = vpop.f32.mrb[0].mxu0
  %v788 = vadd.f32 %v685, %v787
  %v789 = vpop.f32.mrb[0].mxu0
  %v790 = vadd.f32 %v685, %v789
  %791 = vdwg.mxu0
  %792 = vmatprep.subr.bf16.mxu0 %v626
  %793 = vmatpush1.bf16.msra.mxu0 %v625
  %794 = vmatprep.subr.bf16.mxu0 %v630
  %795 = vmatpush1.bf16.msra.mxu0 %v629
  %796 = vmatprep.subr.bf16.mxu0 %v634
  %797 = vmatpush1.bf16.msra.mxu0 %v633
  %798 = vmatprep.subr.bf16.mxu0 %v638
  %799 = vmatpush1.bf16.msra.mxu0 %v637
  %800 = vmatprep.subr.bf16.mxu0 0
  %801 = vmatpush1.bf16.msra.mxu0 0
  %802 = vmatprep.subr.bf16.mxu0 0
  %803 = vmatpush1.bf16.msra.mxu0 0
  %804 = vmatprep.subr.bf16.mxu0 0
  %805 = vmatpush1.bf16.msra.mxu0 0
  %806 = vmatprep.subr.bf16.mxu0 0
  %807 = vmatpush1.bf16.msra.mxu0 0
  %808 = vmatprep.subr.bf16.mxu0 0
  %809 = vmatpush1.bf16.msra.mxu0 0
  %810 = vmatprep.subr.bf16.mxu0 0
  %811 = vmatpush1.bf16.msra.mxu0 0
  %812 = vmatprep.subr.bf16.mxu0 0
  %813 = vmatpush1.bf16.msra.mxu0 0
  %814 = vmatprep.subr.bf16.mxu0 0
  %815 = vmatpush1.bf16.msra.mxu0 0
  %816 = vmatprep.subr.bf16.mxu0 0
  %817 = vmatpush1.bf16.msra.mxu0 0
  %818 = vmatprep.subr.bf16.mxu0 0
  %819 = vmatpush1.bf16.msra.mxu0 0
  %820 = vmatprep.subr.bf16.mxu0 0
  %821 = vmatpush1.bf16.msra.mxu0 0
  %822 = vmatprep.subr.bf16.mxu0 0
  %823 = vmatpush1.bf16.msra.mxu0 0
  %824 = vmatprep.mubr.bf16.mxu0 0
  %825 = vmatmul.mubr.bf16.gmra.mrb[0].mxu0 %v708
  %v826 = vpop.f32.mrb[0].mxu0
  %v827 = vadd.f32 %v650, %v826
  %v828 = vpop.f32.mrb[0].mxu0
  %v829 = vadd.f32 %v650, %v828
  %v830 = vpop.f32.mrb[0].mxu0
  %v831 = vadd.f32 %v655, %v830
  %v832 = vpop.f32.mrb[0].mxu0
  %v833 = vadd.f32 %v655, %v832
  %834 = vmatprep.mubr.bf16.mxu0 0
  %835 = vmatmul.mubr.bf16.gmra.mrb[0].mxu0 %v711
  %v836 = vpop.f32.mrb[0].mxu0
  %v837 = vadd.f32 %v660, %v836
  %v838 = vpop.f32.mrb[0].mxu0
  %v839 = vadd.f32 %v660, %v838
  %v840 = vpop.f32.mrb[0].mxu0
  %v841 = vadd.f32 %v665, %v840
  %v842 = vpop.f32.mrb[0].mxu0
  %v843 = vadd.f32 %v665, %v842
  %844 = vmatprep.mubr.bf16.mxu0 0
  %845 = vmatmul.mubr.bf16.gmra.mrb[0].mxu0 %v714
  %v846 = vpop.f32.mrb[0].mxu0
  %v847 = vadd.f32 %v670, %v846
  %v848 = vpop.f32.mrb[0].mxu0
  %v849 = vadd.f32 %v670, %v848
  %v850 = vpop.f32.mrb[0].mxu0
  %v851 = vadd.f32 %v675, %v850
  %v852 = vpop.f32.mrb[0].mxu0
  %v853 = vadd.f32 %v675, %v852
  %854 = vmatprep.mubr.bf16.mxu0 0
  %855 = vmatmul.mubr.bf16.gmra.mrb[0].mxu0 %v717
  %v856 = vpop.f32.mrb[0].mxu0
  %v857 = vadd.f32 %v680, %v856
  %v858 = vpop.f32.mrb[0].mxu0
  %v859 = vadd.f32 %v680, %v858
  %v860 = vpop.f32.mrb[0].mxu0
  %v861 = vadd.f32 %v685, %v860
  %v862 = vpop.f32.mrb[0].mxu0
  %v863 = vadd.f32 %v685, %v862
  %864 = vdwg.mxu0
  %v865 = vunpack.c.l.bf16 %v332
  %v866 = vunpack.c.l.bf16 %v333
  %v867 = vunpack.c.l.bf16 %v334
  %v868 = vunpack.c.l.bf16 %v335
  %v869 = vunpack.c.h.bf16 %v332
  %v870 = vunpack.c.h.bf16 %v333
  %v871 = vunpack.c.h.bf16 %v334
  %v872 = vunpack.c.h.bf16 %v335
  %v873 = vunpack.c.l.bf16 %v336
  %v874 = vunpack.c.l.bf16 %v337
  %v875 = vunpack.c.l.bf16 %v338
  %v876 = vunpack.c.l.bf16 %v339
  %v877 = vunpack.c.h.bf16 %v336
  %v878 = vunpack.c.h.bf16 %v337
  %v879 = vunpack.c.h.bf16 %v338
  %v880 = vunpack.c.h.bf16 %v339
  %v881 = vunpack.c.l.bf16 %v340
  %v882 = vunpack.c.l.bf16 %v341
  %v883 = vunpack.c.l.bf16 %v342
  %v884 = vunpack.c.l.bf16 %v343
  %v885 = vunpack.c.h.bf16 %v340
  %v886 = vunpack.c.h.bf16 %v341
  %v887 = vunpack.c.h.bf16 %v342
  %v888 = vunpack.c.h.bf16 %v343
  %v889 = vunpack.c.l.bf16 %v344
  %v890 = vunpack.c.l.bf16 %v345
  %v891 = vunpack.c.l.bf16 %v346
  %v892 = vunpack.c.l.bf16 %v347
  %v893 = vunpack.c.h.bf16 %v344
  %v894 = vunpack.c.h.bf16 %v345
  %v895 = vunpack.c.h.bf16 %v346
  %v896 = vunpack.c.h.bf16 %v347
  %v897 = vadd.f32 %v865, %v754
  %v898 = vadd.f32 %v866, %v756
  %v899 = vadd.f32 %v867, %v827
  %v900 = vadd.f32 %v868, %v829
  %v901 = vadd.f32 %v869, %v758
  %v902 = vadd.f32 %v870, %v760
  %v903 = vadd.f32 %v871, %v831
  %v904 = vadd.f32 %v872, %v833
  %v905 = vadd.f32 %v873, %v764
  %v906 = vadd.f32 %v874, %v766
  %v907 = vadd.f32 %v875, %v837
  %v908 = vadd.f32 %v876, %v839
  %v909 = vadd.f32 %v877, %v768
  %v910 = vadd.f32 %v878, %v770
  %v911 = vadd.f32 %v879, %v841
  %v912 = vadd.f32 %v880, %v843
  %v913 = vadd.f32 %v881, %v774
  %v914 = vadd.f32 %v882, %v776
  %v915 = vadd.f32 %v883, %v847
  %v916 = vadd.f32 %v884, %v849
  %v917 = vadd.f32 %v885, %v778
  %v918 = vadd.f32 %v886, %v780
  %v919 = vadd.f32 %v887, %v851
  %v920 = vadd.f32 %v888, %v853
  %v921 = vadd.f32 %v889, %v784
  %v922 = vadd.f32 %v890, %v786
  %v923 = vadd.f32 %v891, %v857
  %v924 = vadd.f32 %v892, %v859
  %v925 = vadd.f32 %v893, %v788
  %v926 = vadd.f32 %v894, %v790
  %v927 = vadd.f32 %v895, %v861
  %v928 = vadd.f32 %v896, %v863
  %v929 = vmax.f32 %v897, 0.0
  %v930 = vmax.f32 %v898, 0.0
  %v931 = vmax.f32 %v899, 0.0
  %v932 = vmax.f32 %v900, 0.0
  %v933 = vmax.f32 %v901, 0.0
  %v934 = vmax.f32 %v902, 0.0
  %v935 = vmax.f32 %v903, 0.0
  %v936 = vmax.f32 %v904, 0.0
  %v937 = vmax.f32 %v905, 0.0
  %v938 = vmax.f32 %v906, 0.0
  %v939 = vmax.f32 %v907, 0.0
  %v940 = vmax.f32 %v908, 0.0
  %v941 = vmax.f32 %v909, 0.0
  %v942 = vmax.f32 %v910, 0.0
  %v943 = vmax.f32 %v911, 0.0
  %v944 = vmax.f32 %v912, 0.0
  %v945 = vmax.f32 %v913, 0.0
  %v946 = vmax.f32 %v914, 0.0
  %v947 = vmax.f32 %v915, 0.0
  %v948 = vmax.f32 %v916, 0.0
  %v949 = vmax.f32 %v917, 0.0
  %v950 = vmax.f32 %v918, 0.0
  %v951 = vmax.f32 %v919, 0.0
  %v952 = vmax.f32 %v920, 0.0
  %v953 = vmax.f32 %v921, 0.0
  %v954 = vmax.f32 %v922, 0.0
  %v955 = vmax.f32 %v923, 0.0
  %v956 = vmax.f32 %v924, 0.0
  %v957 = vmax.f32 %v925, 0.0
  %v958 = vmax.f32 %v926, 0.0
  %v959 = vmax.f32 %v927, 0.0
  %v960 = vmax.f32 %v928, 0.0
  %v961 = vcombine.high %v929, 0.0
  %v963 = vunpack.c.l.s4 1983009808
  %v964 = vunpack.c.0.s8 %v963
  %v965 = vlaneseq
  %v966 = vshrl.u32 %v965, 7
  %v967 = vsub.s32 %v964, %v966
  %v968 = vrot.slane %v929, %v967
  %v970 = vunpack.c.l.s4 1983009808
  %v971 = vunpack.c.0.s8 %v970
  %v972 = vlaneseq
  %v973 = vshrl.u32 %v972, 7
  %v974 = vsub.s32 %v971, %v973
  %v975 = vrot.slane %v961, %v974
  %v976 = vcombine.high %v931, 0.0
  %v978 = vunpack.c.l.s4 1983009808
  %v979 = vunpack.c.0.s8 %v978
  %v980 = vlaneseq
  %v981 = vshrl.u32 %v980, 7
  %v982 = vsub.s32 %v979, %v981
  %v983 = vrot.slane %v931, %v982
  %v985 = vunpack.c.l.s4 1983009808
  %v986 = vunpack.c.0.s8 %v985
  %v987 = vlaneseq
  %v988 = vshrl.u32 %v987, 7
  %v989 = vsub.s32 %v986, %v988
  %v990 = vrot.slane %v976, %v989
  %v991 = vcombine.low %v968, %v983
  %v992 = vcombine.high %v968, %v983
  %v994 = vunpack.c.l.s4 1934713408
  %v995 = vunpack.c.0.s8 %v994
  %v996 = vlaneseq
  %v997 = vshrl.u32 %v996, 7
  %v998 = vsub.s32 %v995, %v997
  %v999 = vrot.slane %v991, %v998
  %v1001 = vunpack.c.l.s4 1934713408
  %v1002 = vunpack.c.0.s8 %v1001
  %v1003 = vlaneseq
  %v1004 = vshrl.u32 %v1003, 7
  %v1005 = vsub.s32 %v1002, %v1004
  %v1006 = vrot.slane %v992, %v1005
  %v1007 = vcombine.low %v975, %v990
  %v1008 = vcombine.high %v975, %v990
  %v1010 = vunpack.c.l.s4 1934713408
  %v1011 = vunpack.c.0.s8 %v1010
  %v1012 = vlaneseq
  %v1013 = vshrl.u32 %v1012, 7
  %v1014 = vsub.s32 %v1011, %v1013
  %v1015 = vrot.slane %v1007, %v1014
  %v1017 = vunpack.c.l.s4 1934713408
  %v1018 = vunpack.c.0.s8 %v1017
  %v1019 = vlaneseq
  %v1020 = vshrl.u32 %v1019, 7
  %v1021 = vsub.s32 %v1018, %v1020
  %v1022 = vrot.slane %v1008, %v1021
  %v1023 = vcombine.high %v999, 0.0
  %v1024 = vcombine.high %v1006, 0.0
  %v1025 = vcombine.high %v1015, 0.0
  %v1026 = vcombine.high %v1022, 0.0
  %v1027 = vcombine.high %v933, 0.0
  %v1029 = vunpack.c.l.s4 1983009808
  %v1030 = vunpack.c.0.s8 %v1029
  %v1031 = vlaneseq
  %v1032 = vshrl.u32 %v1031, 7
  %v1033 = vsub.s32 %v1030, %v1032
  %v1034 = vrot.slane %v933, %v1033
  %v1036 = vunpack.c.l.s4 1983009808
  %v1037 = vunpack.c.0.s8 %v1036
  %v1038 = vlaneseq
  %v1039 = vshrl.u32 %v1038, 7
  %v1040 = vsub.s32 %v1037, %v1039
  %v1041 = vrot.slane %v1027, %v1040
  %v1042 = vcombine.high %v935, 0.0
  %v1044 = vunpack.c.l.s4 1983009808
  %v1045 = vunpack.c.0.s8 %v1044
  %v1046 = vlaneseq
  %v1047 = vshrl.u32 %v1046, 7
  %v1048 = vsub.s32 %v1045, %v1047
  %v1049 = vrot.slane %v935, %v1048
  %v1051 = vunpack.c.l.s4 1983009808
  %v1052 = vunpack.c.0.s8 %v1051
  %v1053 = vlaneseq
  %v1054 = vshrl.u32 %v1053, 7
  %v1055 = vsub.s32 %v1052, %v1054
  %v1056 = vrot.slane %v1042, %v1055
  %v1057 = vcombine.low %v1034, %v1049
  %v1058 = vcombine.high %v1034, %v1049
  %v1060 = vunpack.c.l.s4 1934713408
  %v1061 = vunpack.c.0.s8 %v1060
  %v1062 = vlaneseq
  %v1063 = vshrl.u32 %v1062, 7
  %v1064 = vsub.s32 %v1061, %v1063
  %v1065 = vrot.slane %v1057, %v1064
  %v1067 = vunpack.c.l.s4 1934713408
  %v1068 = vunpack.c.0.s8 %v1067
  %v1069 = vlaneseq
  %v1070 = vshrl.u32 %v1069, 7
  %v1071 = vsub.s32 %v1068, %v1070
  %v1072 = vrot.slane %v1058, %v1071
  %v1073 = vcombine.low %v1041, %v1056
  %v1074 = vcombine.high %v1041, %v1056
  %v1076 = vunpack.c.l.s4 1934713408
  %v1077 = vunpack.c.0.s8 %v1076
  %v1078 = vlaneseq
  %v1079 = vshrl.u32 %v1078, 7
  %v1080 = vsub.s32 %v1077, %v1079
  %v1081 = vrot.slane %v1073, %v1080
  %v1083 = vunpack.c.l.s4 1934713408
  %v1084 = vunpack.c.0.s8 %v1083
  %v1085 = vlaneseq
  %v1086 = vshrl.u32 %v1085, 7
  %v1087 = vsub.s32 %v1084, %v1086
  %v1088 = vrot.slane %v1074, %v1087
  %v1089 = vcombine.high %v1065, 0.0
  %v1090 = vcombine.high %v1072, 0.0
  %v1091 = vcombine.high %v1081, 0.0
  %v1092 = vcombine.high %v1088, 0.0
  %v1093 = vcombine.high %v937, 0.0
  %v1095 = vunpack.c.l.s4 1983009808
  %v1096 = vunpack.c.0.s8 %v1095
  %v1097 = vlaneseq
  %v1098 = vshrl.u32 %v1097, 7
  %v1099 = vsub.s32 %v1096, %v1098
  %v1100 = vrot.slane %v937, %v1099
  %v1102 = vunpack.c.l.s4 1983009808
  %v1103 = vunpack.c.0.s8 %v1102
  %v1104 = vlaneseq
  %v1105 = vshrl.u32 %v1104, 7
  %v1106 = vsub.s32 %v1103, %v1105
  %v1107 = vrot.slane %v1093, %v1106
  %v1108 = vcombine.high %v939, 0.0
  %v1110 = vunpack.c.l.s4 1983009808
  %v1111 = vunpack.c.0.s8 %v1110
  %v1112 = vlaneseq
  %v1113 = vshrl.u32 %v1112, 7
  %v1114 = vsub.s32 %v1111, %v1113
  %v1115 = vrot.slane %v939, %v1114
  %v1117 = vunpack.c.l.s4 1983009808
  %v1118 = vunpack.c.0.s8 %v1117
  %v1119 = vlaneseq
  %v1120 = vshrl.u32 %v1119, 7
  %v1121 = vsub.s32 %v1118, %v1120
  %v1122 = vrot.slane %v1108, %v1121
  %v1123 = vcombine.low %v1100, %v1115
  %v1124 = vcombine.high %v1100, %v1115
  %v1126 = vunpack.c.l.s4 1934713408
  %v1127 = vunpack.c.0.s8 %v1126
  %v1128 = vlaneseq
  %v1129 = vshrl.u32 %v1128, 7
  %v1130 = vsub.s32 %v1127, %v1129
  %v1131 = vrot.slane %v1123, %v1130
  %v1133 = vunpack.c.l.s4 1934713408
  %v1134 = vunpack.c.0.s8 %v1133
  %v1135 = vlaneseq
  %v1136 = vshrl.u32 %v1135, 7
  %v1137 = vsub.s32 %v1134, %v1136
  %v1138 = vrot.slane %v1124, %v1137
  %v1139 = vcombine.low %v1107, %v1122
  %v1140 = vcombine.high %v1107, %v1122
  %v1142 = vunpack.c.l.s4 1934713408
  %v1143 = vunpack.c.0.s8 %v1142
  %v1144 = vlaneseq
  %v1145 = vshrl.u32 %v1144, 7
  %v1146 = vsub.s32 %v1143, %v1145
  %v1147 = vrot.slane %v1139, %v1146
  %v1149 = vunpack.c.l.s4 1934713408
  %v1150 = vunpack.c.0.s8 %v1149
  %v1151 = vlaneseq
  %v1152 = vshrl.u32 %v1151, 7
  %v1153 = vsub.s32 %v1150, %v1152
  %v1154 = vrot.slane %v1140, %v1153
  %v1155 = vcombine.high %v1131, 0.0
  %v1156 = vcombine.high %v1138, 0.0
  %v1157 = vcombine.high %v1147, 0.0
  %v1158 = vcombine.high %v1154, 0.0
  %v1159 = vcombine.high %v941, 0.0
  %v1161 = vunpack.c.l.s4 1983009808
  %v1162 = vunpack.c.0.s8 %v1161
  %v1163 = vlaneseq
  %v1164 = vshrl.u32 %v1163, 7
  %v1165 = vsub.s32 %v1162, %v1164
  %v1166 = vrot.slane %v941, %v1165
  %v1168 = vunpack.c.l.s4 1983009808
  %v1169 = vunpack.c.0.s8 %v1168
  %v1170 = vlaneseq
  %v1171 = vshrl.u32 %v1170, 7
  %v1172 = vsub.s32 %v1169, %v1171
  %v1173 = vrot.slane %v1159, %v1172
  %v1174 = vcombine.high %v943, 0.0
  %v1176 = vunpack.c.l.s4 1983009808
  %v1177 = vunpack.c.0.s8 %v1176
  %v1178 = vlaneseq
  %v1179 = vshrl.u32 %v1178, 7
  %v1180 = vsub.s32 %v1177, %v1179
  %v1181 = vrot.slane %v943, %v1180
  %v1183 = vunpack.c.l.s4 1983009808
  %v1184 = vunpack.c.0.s8 %v1183
  %v1185 = vlaneseq
  %v1186 = vshrl.u32 %v1185, 7
  %v1187 = vsub.s32 %v1184, %v1186
  %v1188 = vrot.slane %v1174, %v1187
  %v1189 = vcombine.low %v1166, %v1181
  %v1190 = vcombine.high %v1166, %v1181
  %v1192 = vunpack.c.l.s4 1934713408
  %v1193 = vunpack.c.0.s8 %v1192
  %v1194 = vlaneseq
  %v1195 = vshrl.u32 %v1194, 7
  %v1196 = vsub.s32 %v1193, %v1195
  %v1197 = vrot.slane %v1189, %v1196
  %v1199 = vunpack.c.l.s4 1934713408
  %v1200 = vunpack.c.0.s8 %v1199
  %v1201 = vlaneseq
  %v1202 = vshrl.u32 %v1201, 7
  %v1203 = vsub.s32 %v1200, %v1202
  %v1204 = vrot.slane %v1190, %v1203
  %v1205 = vcombine.low %v1173, %v1188
  %v1206 = vcombine.high %v1173, %v1188
  %v1208 = vunpack.c.l.s4 1934713408
  %v1209 = vunpack.c.0.s8 %v1208
  %v1210 = vlaneseq
  %v1211 = vshrl.u32 %v1210, 7
  %v1212 = vsub.s32 %v1209, %v1211
  %v1213 = vrot.slane %v1205, %v1212
  %v1215 = vunpack.c.l.s4 1934713408
  %v1216 = vunpack.c.0.s8 %v1215
  %v1217 = vlaneseq
  %v1218 = vshrl.u32 %v1217, 7
  %v1219 = vsub.s32 %v1216, %v1218
  %v1220 = vrot.slane %v1206, %v1219
  %v1221 = vcombine.high %v1197, 0.0
  %v1222 = vcombine.high %v1204, 0.0
  %v1223 = vcombine.high %v1213, 0.0
  %v1224 = vcombine.high %v1220, 0.0
  %v1225 = vcombine.high %v945, 0.0
  %v1227 = vunpack.c.l.s4 1983009808
  %v1228 = vunpack.c.0.s8 %v1227
  %v1229 = vlaneseq
  %v1230 = vshrl.u32 %v1229, 7
  %v1231 = vsub.s32 %v1228, %v1230
  %v1232 = vrot.slane %v945, %v1231
  %v1234 = vunpack.c.l.s4 1983009808
  %v1235 = vunpack.c.0.s8 %v1234
  %v1236 = vlaneseq
  %v1237 = vshrl.u32 %v1236, 7
  %v1238 = vsub.s32 %v1235, %v1237
  %v1239 = vrot.slane %v1225, %v1238
  %v1240 = vcombine.high %v947, 0.0
  %v1242 = vunpack.c.l.s4 1983009808
  %v1243 = vunpack.c.0.s8 %v1242
  %v1244 = vlaneseq
  %v1245 = vshrl.u32 %v1244, 7
  %v1246 = vsub.s32 %v1243, %v1245
  %v1247 = vrot.slane %v947, %v1246
  %v1249 = vunpack.c.l.s4 1983009808
  %v1250 = vunpack.c.0.s8 %v1249
  %v1251 = vlaneseq
  %v1252 = vshrl.u32 %v1251, 7
  %v1253 = vsub.s32 %v1250, %v1252
  %v1254 = vrot.slane %v1240, %v1253
  %v1255 = vcombine.low %v1232, %v1247
  %v1256 = vcombine.high %v1232, %v1247
  %v1258 = vunpack.c.l.s4 1934713408
  %v1259 = vunpack.c.0.s8 %v1258
  %v1260 = vlaneseq
  %v1261 = vshrl.u32 %v1260, 7
  %v1262 = vsub.s32 %v1259, %v1261
  %v1263 = vrot.slane %v1255, %v1262
  %v1265 = vunpack.c.l.s4 1934713408
  %v1266 = vunpack.c.0.s8 %v1265
  %v1267 = vlaneseq
  %v1268 = vshrl.u32 %v1267, 7
  %v1269 = vsub.s32 %v1266, %v1268
  %v1270 = vrot.slane %v1256, %v1269
  %v1271 = vcombine.low %v1239, %v1254
  %v1272 = vcombine.high %v1239, %v1254
  %v1274 = vunpack.c.l.s4 1934713408
  %v1275 = vunpack.c.0.s8 %v1274
  %v1276 = vlaneseq
  %v1277 = vshrl.u32 %v1276, 7
  %v1278 = vsub.s32 %v1275, %v1277
  %v1279 = vrot.slane %v1271, %v1278
  %v1281 = vunpack.c.l.s4 1934713408
  %v1282 = vunpack.c.0.s8 %v1281
  %v1283 = vlaneseq
  %v1284 = vshrl.u32 %v1283, 7
  %v1285 = vsub.s32 %v1282, %v1284
  %v1286 = vrot.slane %v1272, %v1285
  %v1287 = vcombine.high %v1263, 0.0
  %v1288 = vcombine.high %v1270, 0.0
  %v1289 = vcombine.high %v1279, 0.0
  %v1290 = vcombine.high %v1286, 0.0
  %v1291 = vcombine.high %v949, 0.0
  %v1293 = vunpack.c.l.s4 1983009808
  %v1294 = vunpack.c.0.s8 %v1293
  %v1295 = vlaneseq
  %v1296 = vshrl.u32 %v1295, 7
  %v1297 = vsub.s32 %v1294, %v1296
  %v1298 = vrot.slane %v949, %v1297
  %v1300 = vunpack.c.l.s4 1983009808
  %v1301 = vunpack.c.0.s8 %v1300
  %v1302 = vlaneseq
  %v1303 = vshrl.u32 %v1302, 7
  %v1304 = vsub.s32 %v1301, %v1303
  %v1305 = vrot.slane %v1291, %v1304
  %v1306 = vcombine.high %v951, 0.0
  %v1308 = vunpack.c.l.s4 1983009808
  %v1309 = vunpack.c.0.s8 %v1308
  %v1310 = vlaneseq
  %v1311 = vshrl.u32 %v1310, 7
  %v1312 = vsub.s32 %v1309, %v1311
  %v1313 = vrot.slane %v951, %v1312
  %v1315 = vunpack.c.l.s4 1983009808
  %v1316 = vunpack.c.0.s8 %v1315
  %v1317 = vlaneseq
  %v1318 = vshrl.u32 %v1317, 7
  %v1319 = vsub.s32 %v1316, %v1318
  %v1320 = vrot.slane %v1306, %v1319
  %v1321 = vcombine.low %v1298, %v1313
  %v1322 = vcombine.high %v1298, %v1313
  %v1324 = vunpack.c.l.s4 1934713408
  %v1325 = vunpack.c.0.s8 %v1324
  %v1326 = vlaneseq
  %v1327 = vshrl.u32 %v1326, 7
  %v1328 = vsub.s32 %v1325, %v1327
  %v1329 = vrot.slane %v1321, %v1328
  %v1331 = vunpack.c.l.s4 1934713408
  %v1332 = vunpack.c.0.s8 %v1331
  %v1333 = vlaneseq
  %v1334 = vshrl.u32 %v1333, 7
  %v1335 = vsub.s32 %v1332, %v1334
  %v1336 = vrot.slane %v1322, %v1335
  %v1337 = vcombine.low %v1305, %v1320
  %v1338 = vcombine.high %v1305, %v1320
  %v1340 = vunpack.c.l.s4 1934713408
  %v1341 = vunpack.c.0.s8 %v1340
  %v1342 = vlaneseq
  %v1343 = vshrl.u32 %v1342, 7
  %v1344 = vsub.s32 %v1341, %v1343
  %v1345 = vrot.slane %v1337, %v1344
  %v1347 = vunpack.c.l.s4 1934713408
  %v1348 = vunpack.c.0.s8 %v1347
  %v1349 = vlaneseq
  %v1350 = vshrl.u32 %v1349, 7
  %v1351 = vsub.s32 %v1348, %v1350
  %v1352 = vrot.slane %v1338, %v1351
  %v1353 = vcombine.high %v1329, 0.0
  %v1354 = vcombine.high %v1336, 0.0
  %v1355 = vcombine.high %v1345, 0.0
  %v1356 = vcombine.high %v1352, 0.0
  %v1357 = vcombine.high %v953, 0.0
  %v1359 = vunpack.c.l.s4 1983009808
  %v1360 = vunpack.c.0.s8 %v1359
  %v1361 = vlaneseq
  %v1362 = vshrl.u32 %v1361, 7
  %v1363 = vsub.s32 %v1360, %v1362
  %v1364 = vrot.slane %v953, %v1363
  %v1366 = vunpack.c.l.s4 1983009808
  %v1367 = vunpack.c.0.s8 %v1366
  %v1368 = vlaneseq
  %v1369 = vshrl.u32 %v1368, 7
  %v1370 = vsub.s32 %v1367, %v1369
  %v1371 = vrot.slane %v1357, %v1370
  %v1372 = vcombine.high %v955, 0.0
  %v1374 = vunpack.c.l.s4 1983009808
  %v1375 = vunpack.c.0.s8 %v1374
  %v1376 = vlaneseq
  %v1377 = vshrl.u32 %v1376, 7
  %v1378 = vsub.s32 %v1375, %v1377
  %v1379 = vrot.slane %v955, %v1378
  %v1381 = vunpack.c.l.s4 1983009808
  %v1382 = vunpack.c.0.s8 %v1381
  %v1383 = vlaneseq
  %v1384 = vshrl.u32 %v1383, 7
  %v1385 = vsub.s32 %v1382, %v1384
  %v1386 = vrot.slane %v1372, %v1385
  %v1387 = vcombine.low %v1364, %v1379
  %v1388 = vcombine.high %v1364, %v1379
  %v1390 = vunpack.c.l.s4 1934713408
  %v1391 = vunpack.c.0.s8 %v1390
  %v1392 = vlaneseq
  %v1393 = vshrl.u32 %v1392, 7
  %v1394 = vsub.s32 %v1391, %v1393
  %v1395 = vrot.slane %v1387, %v1394
  %v1397 = vunpack.c.l.s4 1934713408
  %v1398 = vunpack.c.0.s8 %v1397
  %v1399 = vlaneseq
  %v1400 = vshrl.u32 %v1399, 7
  %v1401 = vsub.s32 %v1398, %v1400
  %v1402 = vrot.slane %v1388, %v1401
  %v1403 = vcombine.low %v1371, %v1386
  %v1404 = vcombine.high %v1371, %v1386
  %v1406 = vunpack.c.l.s4 1934713408
  %v1407 = vunpack.c.0.s8 %v1406
  %v1408 = vlaneseq
  %v1409 = vshrl.u32 %v1408, 7
  %v1410 = vsub.s32 %v1407, %v1409
  %v1411 = vrot.slane %v1403, %v1410
  %v1413 = vunpack.c.l.s4 1934713408
  %v1414 = vunpack.c.0.s8 %v1413
  %v1415 = vlaneseq
  %v1416 = vshrl.u32 %v1415, 7
  %v1417 = vsub.s32 %v1414, %v1416
  %v1418 = vrot.slane %v1404, %v1417
  %v1419 = vcombine.high %v1395, 0.0
  %v1420 = vcombine.high %v1402, 0.0
  %v1421 = vcombine.high %v1411, 0.0
  %v1422 = vcombine.high %v1418, 0.0
  %v1423 = vcombine.high %v957, 0.0
  %v1425 = vunpack.c.l.s4 1983009808
  %v1426 = vunpack.c.0.s8 %v1425
  %v1427 = vlaneseq
  %v1428 = vshrl.u32 %v1427, 7
  %v1429 = vsub.s32 %v1426, %v1428
  %v1430 = vrot.slane %v957, %v1429
  %v1432 = vunpack.c.l.s4 1983009808
  %v1433 = vunpack.c.0.s8 %v1432
  %v1434 = vlaneseq
  %v1435 = vshrl.u32 %v1434, 7
  %v1436 = vsub.s32 %v1433, %v1435
  %v1437 = vrot.slane %v1423, %v1436
  %v1438 = vcombine.high %v959, 0.0
  %v1440 = vunpack.c.l.s4 1983009808
  %v1441 = vunpack.c.0.s8 %v1440
  %v1442 = vlaneseq
  %v1443 = vshrl.u32 %v1442, 7
  %v1444 = vsub.s32 %v1441, %v1443
  %v1445 = vrot.slane %v959, %v1444
  %v1447 = vunpack.c.l.s4 1983009808
  %v1448 = vunpack.c.0.s8 %v1447
  %v1449 = vlaneseq
  %v1450 = vshrl.u32 %v1449, 7
  %v1451 = vsub.s32 %v1448, %v1450
  %v1452 = vrot.slane %v1438, %v1451
  %v1453 = vcombine.low %v1430, %v1445
  %v1454 = vcombine.high %v1430, %v1445
  %v1456 = vunpack.c.l.s4 1934713408
  %v1457 = vunpack.c.0.s8 %v1456
  %v1458 = vlaneseq
  %v1459 = vshrl.u32 %v1458, 7
  %v1460 = vsub.s32 %v1457, %v1459
  %v1461 = vrot.slane %v1453, %v1460
  %v1463 = vunpack.c.l.s4 1934713408
  %v1464 = vunpack.c.0.s8 %v1463
  %v1465 = vlaneseq
  %v1466 = vshrl.u32 %v1465, 7
  %v1467 = vsub.s32 %v1464, %v1466
  %v1468 = vrot.slane %v1454, %v1467
  %v1469 = vcombine.low %v1437, %v1452
  %v1470 = vcombine.high %v1437, %v1452
  %v1472 = vunpack.c.l.s4 1934713408
  %v1473 = vunpack.c.0.s8 %v1472
  %v1474 = vlaneseq
  %v1475 = vshrl.u32 %v1474, 7
  %v1476 = vsub.s32 %v1473, %v1475
  %v1477 = vrot.slane %v1469, %v1476
  %v1479 = vunpack.c.l.s4 1934713408
  %v1480 = vunpack.c.0.s8 %v1479
  %v1481 = vlaneseq
  %v1482 = vshrl.u32 %v1481, 7
  %v1483 = vsub.s32 %v1480, %v1482
  %v1484 = vrot.slane %v1470, %v1483
  %v1485 = vcombine.high %v1461, 0.0
  %v1486 = vcombine.high %v1468, 0.0
  %v1487 = vcombine.high %v1477, 0.0
  %v1488 = vcombine.high %v1484, 0.0
  %v1489 = vcombine.high %v930, 0.0
  %v1491 = vunpack.c.l.s4 1983009808
  %v1492 = vunpack.c.0.s8 %v1491
  %v1493 = vlaneseq
  %v1494 = vshrl.u32 %v1493, 7
  %v1495 = vsub.s32 %v1492, %v1494
  %v1496 = vrot.slane %v930, %v1495
  %v1498 = vunpack.c.l.s4 1983009808
  %v1499 = vunpack.c.0.s8 %v1498
  %v1500 = vlaneseq
  %v1501 = vshrl.u32 %v1500, 7
  %v1502 = vsub.s32 %v1499, %v1501
  %v1503 = vrot.slane %v1489, %v1502
  %v1504 = vcombine.high %v932, 0.0
  %v1506 = vunpack.c.l.s4 1983009808
  %v1507 = vunpack.c.0.s8 %v1506
  %v1508 = vlaneseq
  %v1509 = vshrl.u32 %v1508, 7
  %v1510 = vsub.s32 %v1507, %v1509
  %v1511 = vrot.slane %v932, %v1510
  %v1513 = vunpack.c.l.s4 1983009808
  %v1514 = vunpack.c.0.s8 %v1513
  %v1515 = vlaneseq
  %v1516 = vshrl.u32 %v1515, 7
  %v1517 = vsub.s32 %v1514, %v1516
  %v1518 = vrot.slane %v1504, %v1517
  %v1519 = vcombine.low %v1496, %v1511
  %v1520 = vcombine.high %v1496, %v1511
  %v1522 = vunpack.c.l.s4 1934713408
  %v1523 = vunpack.c.0.s8 %v1522
  %v1524 = vlaneseq
  %v1525 = vshrl.u32 %v1524, 7
  %v1526 = vsub.s32 %v1523, %v1525
  %v1527 = vrot.slane %v1519, %v1526
  %v1529 = vunpack.c.l.s4 1934713408
  %v1530 = vunpack.c.0.s8 %v1529
  %v1531 = vlaneseq
  %v1532 = vshrl.u32 %v1531, 7
  %v1533 = vsub.s32 %v1530, %v1532
  %v1534 = vrot.slane %v1520, %v1533
  %v1535 = vcombine.low %v1503, %v1518
  %v1536 = vcombine.high %v1503, %v1518
  %v1538 = vunpack.c.l.s4 1934713408
  %v1539 = vunpack.c.0.s8 %v1538
  %v1540 = vlaneseq
  %v1541 = vshrl.u32 %v1540, 7
  %v1542 = vsub.s32 %v1539, %v1541
  %v1543 = vrot.slane %v1535, %v1542
  %v1545 = vunpack.c.l.s4 1934713408
  %v1546 = vunpack.c.0.s8 %v1545
  %v1547 = vlaneseq
  %v1548 = vshrl.u32 %v1547, 7
  %v1549 = vsub.s32 %v1546, %v1548
  %v1550 = vrot.slane %v1536, %v1549
  %v1551 = vcombine.high %v1527, 0.0
  %v1552 = vcombine.high %v1534, 0.0
  %v1553 = vcombine.high %v1543, 0.0
  %v1554 = vcombine.high %v1550, 0.0
  %v1555 = vcombine.high %v934, 0.0
  %v1557 = vunpack.c.l.s4 1983009808
  %v1558 = vunpack.c.0.s8 %v1557
  %v1559 = vlaneseq
  %v1560 = vshrl.u32 %v1559, 7
  %v1561 = vsub.s32 %v1558, %v1560
  %v1562 = vrot.slane %v934, %v1561
  %v1564 = vunpack.c.l.s4 1983009808
  %v1565 = vunpack.c.0.s8 %v1564
  %v1566 = vlaneseq
  %v1567 = vshrl.u32 %v1566, 7
  %v1568 = vsub.s32 %v1565, %v1567
  %v1569 = vrot.slane %v1555, %v1568
  %v1570 = vcombine.high %v936, 0.0
  %v1572 = vunpack.c.l.s4 1983009808
  %v1573 = vunpack.c.0.s8 %v1572
  %v1574 = vlaneseq
  %v1575 = vshrl.u32 %v1574, 7
  %v1576 = vsub.s32 %v1573, %v1575
  %v1577 = vrot.slane %v936, %v1576
  %v1579 = vunpack.c.l.s4 1983009808
  %v1580 = vunpack.c.0.s8 %v1579
  %v1581 = vlaneseq
  %v1582 = vshrl.u32 %v1581, 7
  %v1583 = vsub.s32 %v1580, %v1582
  %v1584 = vrot.slane %v1570, %v1583
  %v1585 = vcombine.low %v1562, %v1577
  %v1586 = vcombine.high %v1562, %v1577
  %v1588 = vunpack.c.l.s4 1934713408
  %v1589 = vunpack.c.0.s8 %v1588
  %v1590 = vlaneseq
  %v1591 = vshrl.u32 %v1590, 7
  %v1592 = vsub.s32 %v1589, %v1591
  %v1593 = vrot.slane %v1585, %v1592
  %v1595 = vunpack.c.l.s4 1934713408
  %v1596 = vunpack.c.0.s8 %v1595
  %v1597 = vlaneseq
  %v1598 = vshrl.u32 %v1597, 7
  %v1599 = vsub.s32 %v1596, %v1598
  %v1600 = vrot.slane %v1586, %v1599
  %v1601 = vcombine.low %v1569, %v1584
  %v1602 = vcombine.high %v1569, %v1584
  %v1604 = vunpack.c.l.s4 1934713408
  %v1605 = vunpack.c.0.s8 %v1604
  %v1606 = vlaneseq
  %v1607 = vshrl.u32 %v1606, 7
  %v1608 = vsub.s32 %v1605, %v1607
  %v1609 = vrot.slane %v1601, %v1608
  %v1611 = vunpack.c.l.s4 1934713408
  %v1612 = vunpack.c.0.s8 %v1611
  %v1613 = vlaneseq
  %v1614 = vshrl.u32 %v1613, 7
  %v1615 = vsub.s32 %v1612, %v1614
  %v1616 = vrot.slane %v1602, %v1615
  %v1617 = vcombine.high %v1593, 0.0
  %v1618 = vcombine.high %v1600, 0.0
  %v1619 = vcombine.high %v1609, 0.0
  %v1620 = vcombine.high %v1616, 0.0
  %v1621 = vcombine.high %v938, 0.0
  %v1623 = vunpack.c.l.s4 1983009808
  %v1624 = vunpack.c.0.s8 %v1623
  %v1625 = vlaneseq
  %v1626 = vshrl.u32 %v1625, 7
  %v1627 = vsub.s32 %v1624, %v1626
  %v1628 = vrot.slane %v938, %v1627
  %v1630 = vunpack.c.l.s4 1983009808
  %v1631 = vunpack.c.0.s8 %v1630
  %v1632 = vlaneseq
  %v1633 = vshrl.u32 %v1632, 7
  %v1634 = vsub.s32 %v1631, %v1633
  %v1635 = vrot.slane %v1621, %v1634
  %v1636 = vcombine.high %v940, 0.0
  %v1638 = vunpack.c.l.s4 1983009808
  %v1639 = vunpack.c.0.s8 %v1638
  %v1640 = vlaneseq
  %v1641 = vshrl.u32 %v1640, 7
  %v1642 = vsub.s32 %v1639, %v1641
  %v1643 = vrot.slane %v940, %v1642
  %v1645 = vunpack.c.l.s4 1983009808
  %v1646 = vunpack.c.0.s8 %v1645
  %v1647 = vlaneseq
  %v1648 = vshrl.u32 %v1647, 7
  %v1649 = vsub.s32 %v1646, %v1648
  %v1650 = vrot.slane %v1636, %v1649
  %v1651 = vcombine.low %v1628, %v1643
  %v1652 = vcombine.high %v1628, %v1643
  %v1654 = vunpack.c.l.s4 1934713408
  %v1655 = vunpack.c.0.s8 %v1654
  %v1656 = vlaneseq
  %v1657 = vshrl.u32 %v1656, 7
  %v1658 = vsub.s32 %v1655, %v1657
  %v1659 = vrot.slane %v1651, %v1658
  %v1661 = vunpack.c.l.s4 1934713408
  %v1662 = vunpack.c.0.s8 %v1661
  %v1663 = vlaneseq
  %v1664 = vshrl.u32 %v1663, 7
  %v1665 = vsub.s32 %v1662, %v1664
  %v1666 = vrot.slane %v1652, %v1665
  %v1667 = vcombine.low %v1635, %v1650
  %v1668 = vcombine.high %v1635, %v1650
  %v1670 = vunpack.c.l.s4 1934713408
  %v1671 = vunpack.c.0.s8 %v1670
  %v1672 = vlaneseq
  %v1673 = vshrl.u32 %v1672, 7
  %v1674 = vsub.s32 %v1671, %v1673
  %v1675 = vrot.slane %v1667, %v1674
  %v1677 = vunpack.c.l.s4 1934713408
  %v1678 = vunpack.c.0.s8 %v1677
  %v1679 = vlaneseq
  %v1680 = vshrl.u32 %v1679, 7
  %v1681 = vsub.s32 %v1678, %v1680
  %v1682 = vrot.slane %v1668, %v1681
  %v1683 = vcombine.high %v1659, 0.0
  %v1684 = vcombine.high %v1666, 0.0
  %v1685 = vcombine.high %v1675, 0.0
  %v1686 = vcombine.high %v1682, 0.0
  %v1687 = vcombine.high %v942, 0.0
  %v1689 = vunpack.c.l.s4 1983009808
  %v1690 = vunpack.c.0.s8 %v1689
  %v1691 = vlaneseq
  %v1692 = vshrl.u32 %v1691, 7
  %v1693 = vsub.s32 %v1690, %v1692
  %v1694 = vrot.slane %v942, %v1693
  %v1696 = vunpack.c.l.s4 1983009808
  %v1697 = vunpack.c.0.s8 %v1696
  %v1698 = vlaneseq
  %v1699 = vshrl.u32 %v1698, 7
  %v1700 = vsub.s32 %v1697, %v1699
  %v1701 = vrot.slane %v1687, %v1700
  %v1702 = vcombine.high %v944, 0.0
  %v1704 = vunpack.c.l.s4 1983009808
  %v1705 = vunpack.c.0.s8 %v1704
  %v1706 = vlaneseq
  %v1707 = vshrl.u32 %v1706, 7
  %v1708 = vsub.s32 %v1705, %v1707
  %v1709 = vrot.slane %v944, %v1708
  %v1711 = vunpack.c.l.s4 1983009808
  %v1712 = vunpack.c.0.s8 %v1711
  %v1713 = vlaneseq
  %v1714 = vshrl.u32 %v1713, 7
  %v1715 = vsub.s32 %v1712, %v1714
  %v1716 = vrot.slane %v1702, %v1715
  %v1717 = vcombine.low %v1694, %v1709
  %v1718 = vcombine.high %v1694, %v1709
  %v1720 = vunpack.c.l.s4 1934713408
  %v1721 = vunpack.c.0.s8 %v1720
  %v1722 = vlaneseq
  %v1723 = vshrl.u32 %v1722, 7
  %v1724 = vsub.s32 %v1721, %v1723
  %v1725 = vrot.slane %v1717, %v1724
  %v1727 = vunpack.c.l.s4 1934713408
  %v1728 = vunpack.c.0.s8 %v1727
  %v1729 = vlaneseq
  %v1730 = vshrl.u32 %v1729, 7
  %v1731 = vsub.s32 %v1728, %v1730
  %v1732 = vrot.slane %v1718, %v1731
  %v1733 = vcombine.low %v1701, %v1716
  %v1734 = vcombine.high %v1701, %v1716
  %v1736 = vunpack.c.l.s4 1934713408
  %v1737 = vunpack.c.0.s8 %v1736
  %v1738 = vlaneseq
  %v1739 = vshrl.u32 %v1738, 7
  %v1740 = vsub.s32 %v1737, %v1739
  %v1741 = vrot.slane %v1733, %v1740
  %v1743 = vunpack.c.l.s4 1934713408
  %v1744 = vunpack.c.0.s8 %v1743
  %v1745 = vlaneseq
  %v1746 = vshrl.u32 %v1745, 7
  %v1747 = vsub.s32 %v1744, %v1746
  %v1748 = vrot.slane %v1734, %v1747
  %v1749 = vcombine.high %v1725, 0.0
  %v1750 = vcombine.high %v1732, 0.0
  %v1751 = vcombine.high %v1741, 0.0
  %v1752 = vcombine.high %v1748, 0.0
  %v1753 = vcombine.high %v946, 0.0
  %v1755 = vunpack.c.l.s4 1983009808
  %v1756 = vunpack.c.0.s8 %v1755
  %v1757 = vlaneseq
  %v1758 = vshrl.u32 %v1757, 7
  %v1759 = vsub.s32 %v1756, %v1758
  %v1760 = vrot.slane %v946, %v1759
  %v1762 = vunpack.c.l.s4 1983009808
  %v1763 = vunpack.c.0.s8 %v1762
  %v1764 = vlaneseq
  %v1765 = vshrl.u32 %v1764, 7
  %v1766 = vsub.s32 %v1763, %v1765
  %v1767 = vrot.slane %v1753, %v1766
  %v1768 = vcombine.high %v948, 0.0
  %v1770 = vunpack.c.l.s4 1983009808
  %v1771 = vunpack.c.0.s8 %v1770
  %v1772 = vlaneseq
  %v1773 = vshrl.u32 %v1772, 7
  %v1774 = vsub.s32 %v1771, %v1773
  %v1775 = vrot.slane %v948, %v1774
  %v1777 = vunpack.c.l.s4 1983009808
  %v1778 = vunpack.c.0.s8 %v1777
  %v1779 = vlaneseq
  %v1780 = vshrl.u32 %v1779, 7
  %v1781 = vsub.s32 %v1778, %v1780
  %v1782 = vrot.slane %v1768, %v1781
  %v1783 = vcombine.low %v1760, %v1775
  %v1784 = vcombine.high %v1760, %v1775
  %v1786 = vunpack.c.l.s4 1934713408
  %v1787 = vunpack.c.0.s8 %v1786
  %v1788 = vlaneseq
  %v1789 = vshrl.u32 %v1788, 7
  %v1790 = vsub.s32 %v1787, %v1789
  %v1791 = vrot.slane %v1783, %v1790
  %v1793 = vunpack.c.l.s4 1934713408
  %v1794 = vunpack.c.0.s8 %v1793
  %v1795 = vlaneseq
  %v1796 = vshrl.u32 %v1795, 7
  %v1797 = vsub.s32 %v1794, %v1796
  %v1798 = vrot.slane %v1784, %v1797
  %v1799 = vcombine.low %v1767, %v1782
  %v1800 = vcombine.high %v1767, %v1782
  %v1802 = vunpack.c.l.s4 1934713408
  %v1803 = vunpack.c.0.s8 %v1802
  %v1804 = vlaneseq
  %v1805 = vshrl.u32 %v1804, 7
  %v1806 = vsub.s32 %v1803, %v1805
  %v1807 = vrot.slane %v1799, %v1806
  %v1809 = vunpack.c.l.s4 1934713408
  %v1810 = vunpack.c.0.s8 %v1809
  %v1811 = vlaneseq
  %v1812 = vshrl.u32 %v1811, 7
  %v1813 = vsub.s32 %v1810, %v1812
  %v1814 = vrot.slane %v1800, %v1813
  %v1815 = vcombine.high %v1791, 0.0
  %v1816 = vcombine.high %v1798, 0.0
  %v1817 = vcombine.high %v1807, 0.0
  %v1818 = vcombine.high %v1814, 0.0
  %v1819 = vcombine.high %v950, 0.0
  %v1821 = vunpack.c.l.s4 1983009808
  %v1822 = vunpack.c.0.s8 %v1821
  %v1823 = vlaneseq
  %v1824 = vshrl.u32 %v1823, 7
  %v1825 = vsub.s32 %v1822, %v1824
  %v1826 = vrot.slane %v950, %v1825
  %v1828 = vunpack.c.l.s4 1983009808
  %v1829 = vunpack.c.0.s8 %v1828
  %v1830 = vlaneseq
  %v1831 = vshrl.u32 %v1830, 7
  %v1832 = vsub.s32 %v1829, %v1831
  %v1833 = vrot.slane %v1819, %v1832
  %v1834 = vcombine.high %v952, 0.0
  %v1836 = vunpack.c.l.s4 1983009808
  %v1837 = vunpack.c.0.s8 %v1836
  %v1838 = vlaneseq
  %v1839 = vshrl.u32 %v1838, 7
  %v1840 = vsub.s32 %v1837, %v1839
  %v1841 = vrot.slane %v952, %v1840
  %v1843 = vunpack.c.l.s4 1983009808
  %v1844 = vunpack.c.0.s8 %v1843
  %v1845 = vlaneseq
  %v1846 = vshrl.u32 %v1845, 7
  %v1847 = vsub.s32 %v1844, %v1846
  %v1848 = vrot.slane %v1834, %v1847
  %v1849 = vcombine.low %v1826, %v1841
  %v1850 = vcombine.high %v1826, %v1841
  %v1852 = vunpack.c.l.s4 1934713408
  %v1853 = vunpack.c.0.s8 %v1852
  %v1854 = vlaneseq
  %v1855 = vshrl.u32 %v1854, 7
  %v1856 = vsub.s32 %v1853, %v1855
  %v1857 = vrot.slane %v1849, %v1856
  %v1859 = vunpack.c.l.s4 1934713408
  %v1860 = vunpack.c.0.s8 %v1859
  %v1861 = vlaneseq
  %v1862 = vshrl.u32 %v1861, 7
  %v1863 = vsub.s32 %v1860, %v1862
  %v1864 = vrot.slane %v1850, %v1863
  %v1865 = vcombine.low %v1833, %v1848
  %v1866 = vcombine.high %v1833, %v1848
  %v1868 = vunpack.c.l.s4 1934713408
  %v1869 = vunpack.c.0.s8 %v1868
  %v1870 = vlaneseq
  %v1871 = vshrl.u32 %v1870, 7
  %v1872 = vsub.s32 %v1869, %v1871
  %v1873 = vrot.slane %v1865, %v1872
  %v1875 = vunpack.c.l.s4 1934713408
  %v1876 = vunpack.c.0.s8 %v1875
  %v1877 = vlaneseq
  %v1878 = vshrl.u32 %v1877, 7
  %v1879 = vsub.s32 %v1876, %v1878
  %v1880 = vrot.slane %v1866, %v1879
  %v1881 = vcombine.high %v1857, 0.0
  %v1882 = vcombine.high %v1864, 0.0
  %v1883 = vcombine.high %v1873, 0.0
  %v1884 = vcombine.high %v1880, 0.0
  %v1885 = vcombine.high %v954, 0.0
  %v1887 = vunpack.c.l.s4 1983009808
  %v1888 = vunpack.c.0.s8 %v1887
  %v1889 = vlaneseq
  %v1890 = vshrl.u32 %v1889, 7
  %v1891 = vsub.s32 %v1888, %v1890
  %v1892 = vrot.slane %v954, %v1891
  %v1894 = vunpack.c.l.s4 1983009808
  %v1895 = vunpack.c.0.s8 %v1894
  %v1896 = vlaneseq
  %v1897 = vshrl.u32 %v1896, 7
  %v1898 = vsub.s32 %v1895, %v1897
  %v1899 = vrot.slane %v1885, %v1898
  %v1900 = vcombine.high %v956, 0.0
  %v1902 = vunpack.c.l.s4 1983009808
  %v1903 = vunpack.c.0.s8 %v1902
  %v1904 = vlaneseq
  %v1905 = vshrl.u32 %v1904, 7
  %v1906 = vsub.s32 %v1903, %v1905
  %v1907 = vrot.slane %v956, %v1906
  %v1909 = vunpack.c.l.s4 1983009808
  %v1910 = vunpack.c.0.s8 %v1909
  %v1911 = vlaneseq
  %v1912 = vshrl.u32 %v1911, 7
  %v1913 = vsub.s32 %v1910, %v1912
  %v1914 = vrot.slane %v1900, %v1913
  %v1915 = vcombine.low %v1892, %v1907
  %v1916 = vcombine.high %v1892, %v1907
  %v1918 = vunpack.c.l.s4 1934713408
  %v1919 = vunpack.c.0.s8 %v1918
  %v1920 = vlaneseq
  %v1921 = vshrl.u32 %v1920, 7
  %v1922 = vsub.s32 %v1919, %v1921
  %v1923 = vrot.slane %v1915, %v1922
  %v1925 = vunpack.c.l.s4 1934713408
  %v1926 = vunpack.c.0.s8 %v1925
  %v1927 = vlaneseq
  %v1928 = vshrl.u32 %v1927, 7
  %v1929 = vsub.s32 %v1926, %v1928
  %v1930 = vrot.slane %v1916, %v1929
  %v1931 = vcombine.low %v1899, %v1914
  %v1932 = vcombine.high %v1899, %v1914
  %v1934 = vunpack.c.l.s4 1934713408
  %v1935 = vunpack.c.0.s8 %v1934
  %v1936 = vlaneseq
  %v1937 = vshrl.u32 %v1936, 7
  %v1938 = vsub.s32 %v1935, %v1937
  %v1939 = vrot.slane %v1931, %v1938
  %v1941 = vunpack.c.l.s4 1934713408
  %v1942 = vunpack.c.0.s8 %v1941
  %v1943 = vlaneseq
  %v1944 = vshrl.u32 %v1943, 7
  %v1945 = vsub.s32 %v1942, %v1944
  %v1946 = vrot.slane %v1932, %v1945
  %v1947 = vcombine.high %v1923, 0.0
  %v1948 = vcombine.high %v1930, 0.0
  %v1949 = vcombine.high %v1939, 0.0
  %v1950 = vcombine.high %v1946, 0.0
  %v1951 = vcombine.high %v958, 0.0
  %v1953 = vunpack.c.l.s4 1983009808
  %v1954 = vunpack.c.0.s8 %v1953
  %v1955 = vlaneseq
  %v1956 = vshrl.u32 %v1955, 7
  %v1957 = vsub.s32 %v1954, %v1956
  %v1958 = vrot.slane %v958, %v1957
  %v1960 = vunpack.c.l.s4 1983009808
  %v1961 = vunpack.c.0.s8 %v1960
  %v1962 = vlaneseq
  %v1963 = vshrl.u32 %v1962, 7
  %v1964 = vsub.s32 %v1961, %v1963
  %v1965 = vrot.slane %v1951, %v1964
  %v1966 = vcombine.high %v960, 0.0
  %v1968 = vunpack.c.l.s4 1983009808
  %v1969 = vunpack.c.0.s8 %v1968
  %v1970 = vlaneseq
  %v1971 = vshrl.u32 %v1970, 7
  %v1972 = vsub.s32 %v1969, %v1971
  %v1973 = vrot.slane %v960, %v1972
  %v1975 = vunpack.c.l.s4 1983009808
  %v1976 = vunpack.c.0.s8 %v1975
  %v1977 = vlaneseq
  %v1978 = vshrl.u32 %v1977, 7
  %v1979 = vsub.s32 %v1976, %v1978
  %v1980 = vrot.slane %v1966, %v1979
  %v1981 = vcombine.low %v1958, %v1973
  %v1982 = vcombine.high %v1958, %v1973
  %v1984 = vunpack.c.l.s4 1934713408
  %v1985 = vunpack.c.0.s8 %v1984
  %v1986 = vlaneseq
  %v1987 = vshrl.u32 %v1986, 7
  %v1988 = vsub.s32 %v1985, %v1987
  %v1989 = vrot.slane %v1981, %v1988
  %v1991 = vunpack.c.l.s4 1934713408
  %v1992 = vunpack.c.0.s8 %v1991
  %v1993 = vlaneseq
  %v1994 = vshrl.u32 %v1993, 7
  %v1995 = vsub.s32 %v1992, %v1994
  %v1996 = vrot.slane %v1982, %v1995
  %v1997 = vcombine.low %v1965, %v1980
  %v1998 = vcombine.high %v1965, %v1980
  %v2000 = vunpack.c.l.s4 1934713408
  %v2001 = vunpack.c.0.s8 %v2000
  %v2002 = vlaneseq
  %v2003 = vshrl.u32 %v2002, 7
  %v2004 = vsub.s32 %v2001, %v2003
  %v2005 = vrot.slane %v1997, %v2004
  %v2007 = vunpack.c.l.s4 1934713408
  %v2008 = vunpack.c.0.s8 %v2007
  %v2009 = vlaneseq
  %v2010 = vshrl.u32 %v2009, 7
  %v2011 = vsub.s32 %v2008, %v2010
  %v2012 = vrot.slane %v1998, %v2011
  %v2013 = vcombine.high %v1989, 0.0
  %v2014 = vcombine.high %v1996, 0.0
  %v2015 = vcombine.high %v2005, 0.0
  %v2016 = vcombine.high %v2012, 0.0
  %v2017 = vsel %vm141, %v999, 0.0
  %v2018 = vsel %vm141, %v1527, 0.0
  %v2019 = vadd.f32 %v2017, %v2018
  %2020 = vadd.xlane.f32.xlu0 %v2019
  %v2021 = vpop.xlane.xlu0 %2020
  %v2022 = vsel %vm141, %v1023, 0.0
  %v2023 = vsel %vm141, %v1551, 0.0
  %v2024 = vadd.f32 %v2022, %v2023
  %2025 = vadd.xlane.f32.xlu0 %v2024
  %v2026 = vpop.xlane.xlu0 %2025
  %v2027 = vsel %vm141, %v1006, 0.0
  %v2028 = vsel %vm141, %v1534, 0.0
  %v2029 = vadd.f32 %v2027, %v2028
  %2030 = vadd.xlane.f32.xlu0 %v2029
  %v2031 = vpop.xlane.xlu0 %2030
  %v2032 = vsel %vm141, %v1024, 0.0
  %v2033 = vsel %vm141, %v1552, 0.0
  %v2034 = vadd.f32 %v2032, %v2033
  %2035 = vadd.xlane.f32.xlu0 %v2034
  %v2036 = vpop.xlane.xlu0 %2035
  %v2037 = vsel %vm141, %v1015, 0.0
  %v2038 = vsel %vm141, %v1543, 0.0
  %v2039 = vadd.f32 %v2037, %v2038
  %2040 = vadd.xlane.f32.xlu0 %v2039
  %v2041 = vpop.xlane.xlu0 %2040
  %v2042 = vsel %vm141, %v1025, 0.0
  %v2043 = vsel %vm141, %v1553, 0.0
  %v2044 = vadd.f32 %v2042, %v2043
  %2045 = vadd.xlane.f32.xlu0 %v2044
  %v2046 = vpop.xlane.xlu0 %2045
  %v2047 = vsel %vm141, %v1022, 0.0
  %v2048 = vsel %vm141, %v1550, 0.0
  %v2049 = vadd.f32 %v2047, %v2048
  %2050 = vadd.xlane.f32.xlu0 %v2049
  %v2051 = vpop.xlane.xlu0 %2050
  %v2052 = vsel %vm141, %v1026, 0.0
  %v2053 = vsel %vm141, %v1554, 0.0
  %v2054 = vadd.f32 %v2052, %v2053
  %2055 = vadd.xlane.f32.xlu0 %v2054
  %v2056 = vpop.xlane.xlu0 %2055
  %v2057 = vsel %vm141, %v1065, 0.0
  %v2058 = vsel %vm141, %v1593, 0.0
  %v2059 = vadd.f32 %v2057, %v2058
  %2060 = vadd.xlane.f32.xlu0 %v2059
  %v2061 = vpop.xlane.xlu0 %2060
  %v2062 = vsel %vm141, %v1089, 0.0
  %v2063 = vsel %vm141, %v1617, 0.0
  %v2064 = vadd.f32 %v2062, %v2063
  %2065 = vadd.xlane.f32.xlu0 %v2064
  %v2066 = vpop.xlane.xlu0 %2065
  %v2067 = vsel %vm141, %v1072, 0.0
  %v2068 = vsel %vm141, %v1600, 0.0
  %v2069 = vadd.f32 %v2067, %v2068
  %2070 = vadd.xlane.f32.xlu0 %v2069
  %v2071 = vpop.xlane.xlu0 %2070
  %v2072 = vsel %vm141, %v1090, 0.0
  %v2073 = vsel %vm141, %v1618, 0.0
  %v2074 = vadd.f32 %v2072, %v2073
  %2075 = vadd.xlane.f32.xlu0 %v2074
  %v2076 = vpop.xlane.xlu0 %2075
  %v2077 = vsel %vm141, %v1081, 0.0
  %v2078 = vsel %vm141, %v1609, 0.0
  %v2079 = vadd.f32 %v2077, %v2078
  %2080 = vadd.xlane.f32.xlu0 %v2079
  %v2081 = vpop.xlane.xlu0 %2080
  %v2082 = vsel %vm141, %v1091, 0.0
  %v2083 = vsel %vm141, %v1619, 0.0
  %v2084 = vadd.f32 %v2082, %v2083
  %2085 = vadd.xlane.f32.xlu0 %v2084
  %v2086 = vpop.xlane.xlu0 %2085
  %v2087 = vsel %vm141, %v1088, 0.0
  %v2088 = vsel %vm141, %v1616, 0.0
  %v2089 = vadd.f32 %v2087, %v2088
  %2090 = vadd.xlane.f32.xlu0 %v2089
  %v2091 = vpop.xlane.xlu0 %2090
  %v2092 = vsel %vm141, %v1092, 0.0
  %v2093 = vsel %vm141, %v1620, 0.0
  %v2094 = vadd.f32 %v2092, %v2093
  %2095 = vadd.xlane.f32.xlu0 %v2094
  %v2096 = vpop.xlane.xlu0 %2095
  %v2097 = vsel %vm141, %v1131, 0.0
  %v2098 = vsel %vm141, %v1659, 0.0
  %v2099 = vadd.f32 %v2097, %v2098
  %2100 = vadd.xlane.f32.xlu0 %v2099
  %v2101 = vpop.xlane.xlu0 %2100
  %v2102 = vsel %vm141, %v1155, 0.0
  %v2103 = vsel %vm141, %v1683, 0.0
  %v2104 = vadd.f32 %v2102, %v2103
  %2105 = vadd.xlane.f32.xlu0 %v2104
  %v2106 = vpop.xlane.xlu0 %2105
  %v2107 = vsel %vm141, %v1138, 0.0
  %v2108 = vsel %vm141, %v1666, 0.0
  %v2109 = vadd.f32 %v2107, %v2108
  %2110 = vadd.xlane.f32.xlu0 %v2109
  %v2111 = vpop.xlane.xlu0 %2110
  %v2112 = vsel %vm141, %v1156, 0.0
  %v2113 = vsel %vm141, %v1684, 0.0
  %v2114 = vadd.f32 %v2112, %v2113
  %2115 = vadd.xlane.f32.xlu0 %v2114
  %v2116 = vpop.xlane.xlu0 %2115
  %v2117 = vsel %vm141, %v1147, 0.0
  %v2118 = vsel %vm141, %v1675, 0.0
  %v2119 = vadd.f32 %v2117, %v2118
  %2120 = vadd.xlane.f32.xlu0 %v2119
  %v2121 = vpop.xlane.xlu0 %2120
  %v2122 = vsel %vm141, %v1157, 0.0
  %v2123 = vsel %vm141, %v1685, 0.0
  %v2124 = vadd.f32 %v2122, %v2123
  %2125 = vadd.xlane.f32.xlu0 %v2124
  %v2126 = vpop.xlane.xlu0 %2125
  %v2127 = vsel %vm141, %v1154, 0.0
  %v2128 = vsel %vm141, %v1682, 0.0
  %v2129 = vadd.f32 %v2127, %v2128
  %2130 = vadd.xlane.f32.xlu0 %v2129
  %v2131 = vpop.xlane.xlu0 %2130
  %v2132 = vsel %vm141, %v1158, 0.0
  %v2133 = vsel %vm141, %v1686, 0.0
  %v2134 = vadd.f32 %v2132, %v2133
  %2135 = vadd.xlane.f32.xlu0 %v2134
  %v2136 = vpop.xlane.xlu0 %2135
  %v2137 = vsel %vm141, %v1197, 0.0
  %v2138 = vsel %vm141, %v1725, 0.0
  %v2139 = vadd.f32 %v2137, %v2138
  %2140 = vadd.xlane.f32.xlu0 %v2139
  %v2141 = vpop.xlane.xlu0 %2140
  %v2142 = vsel %vm141, %v1221, 0.0
  %v2143 = vsel %vm141, %v1749, 0.0
  %v2144 = vadd.f32 %v2142, %v2143
  %2145 = vadd.xlane.f32.xlu0 %v2144
  %v2146 = vpop.xlane.xlu0 %2145
  %v2147 = vsel %vm141, %v1204, 0.0
  %v2148 = vsel %vm141, %v1732, 0.0
  %v2149 = vadd.f32 %v2147, %v2148
  %2150 = vadd.xlane.f32.xlu0 %v2149
  %v2151 = vpop.xlane.xlu0 %2150
  %v2152 = vsel %vm141, %v1222, 0.0
  %v2153 = vsel %vm141, %v1750, 0.0
  %v2154 = vadd.f32 %v2152, %v2153
  %2155 = vadd.xlane.f32.xlu0 %v2154
  %v2156 = vpop.xlane.xlu0 %2155
  %v2157 = vsel %vm141, %v1213, 0.0
  %v2158 = vsel %vm141, %v1741, 0.0
  %v2159 = vadd.f32 %v2157, %v2158
  %2160 = vadd.xlane.f32.xlu0 %v2159
  %v2161 = vpop.xlane.xlu0 %2160
  %v2162 = vsel %vm141, %v1223, 0.0
  %v2163 = vsel %vm141, %v1751, 0.0
  %v2164 = vadd.f32 %v2162, %v2163
  %2165 = vadd.xlane.f32.xlu0 %v2164
  %v2166 = vpop.xlane.xlu0 %2165
  %v2167 = vsel %vm141, %v1220, 0.0
  %v2168 = vsel %vm141, %v1748, 0.0
  %v2169 = vadd.f32 %v2167, %v2168
  %2170 = vadd.xlane.f32.xlu0 %v2169
  %v2171 = vpop.xlane.xlu0 %2170
  %v2172 = vsel %vm141, %v1224, 0.0
  %v2173 = vsel %vm141, %v1752, 0.0
  %v2174 = vadd.f32 %v2172, %v2173
  %2175 = vadd.xlane.f32.xlu0 %v2174
  %v2176 = vpop.xlane.xlu0 %2175
  %v2177 = vsel %vm141, %v1263, 0.0
  %v2178 = vsel %vm141, %v1791, 0.0
  %v2179 = vadd.f32 %v2177, %v2178
  %2180 = vadd.xlane.f32.xlu0 %v2179
  %v2181 = vpop.xlane.xlu0 %2180
  %v2182 = vsel %vm141, %v1287, 0.0
  %v2183 = vsel %vm141, %v1815, 0.0
  %v2184 = vadd.f32 %v2182, %v2183
  %2185 = vadd.xlane.f32.xlu0 %v2184
  %v2186 = vpop.xlane.xlu0 %2185
  %v2187 = vsel %vm141, %v1270, 0.0
  %v2188 = vsel %vm141, %v1798, 0.0
  %v2189 = vadd.f32 %v2187, %v2188
  %2190 = vadd.xlane.f32.xlu0 %v2189
  %v2191 = vpop.xlane.xlu0 %2190
  %v2192 = vsel %vm141, %v1288, 0.0
  %v2193 = vsel %vm141, %v1816, 0.0
  %v2194 = vadd.f32 %v2192, %v2193
  %2195 = vadd.xlane.f32.xlu0 %v2194
  %v2196 = vpop.xlane.xlu0 %2195
  %v2197 = vsel %vm141, %v1279, 0.0
  %v2198 = vsel %vm141, %v1807, 0.0
  %v2199 = vadd.f32 %v2197, %v2198
  %2200 = vadd.xlane.f32.xlu0 %v2199
  %v2201 = vpop.xlane.xlu0 %2200
  %v2202 = vsel %vm141, %v1289, 0.0
  %v2203 = vsel %vm141, %v1817, 0.0
  %v2204 = vadd.f32 %v2202, %v2203
  %2205 = vadd.xlane.f32.xlu0 %v2204
  %v2206 = vpop.xlane.xlu0 %2205
  %v2207 = vsel %vm141, %v1286, 0.0
  %v2208 = vsel %vm141, %v1814, 0.0
  %v2209 = vadd.f32 %v2207, %v2208
  %2210 = vadd.xlane.f32.xlu0 %v2209
  %v2211 = vpop.xlane.xlu0 %2210
  %v2212 = vsel %vm141, %v1290, 0.0
  %v2213 = vsel %vm141, %v1818, 0.0
  %v2214 = vadd.f32 %v2212, %v2213
  %2215 = vadd.xlane.f32.xlu0 %v2214
  %v2216 = vpop.xlane.xlu0 %2215
  %v2217 = vsel %vm141, %v1329, 0.0
  %v2218 = vsel %vm141, %v1857, 0.0
  %v2219 = vadd.f32 %v2217, %v2218
  %2220 = vadd.xlane.f32.xlu0 %v2219
  %v2221 = vpop.xlane.xlu0 %2220
  %v2222 = vsel %vm141, %v1353, 0.0
  %v2223 = vsel %vm141, %v1881, 0.0
  %v2224 = vadd.f32 %v2222, %v2223
  %2225 = vadd.xlane.f32.xlu0 %v2224
  %v2226 = vpop.xlane.xlu0 %2225
  %v2227 = vsel %vm141, %v1336, 0.0
  %v2228 = vsel %vm141, %v1864, 0.0
  %v2229 = vadd.f32 %v2227, %v2228
  %2230 = vadd.xlane.f32.xlu0 %v2229
  %v2231 = vpop.xlane.xlu0 %2230
  %v2232 = vsel %vm141, %v1354, 0.0
  %v2233 = vsel %vm141, %v1882, 0.0
  %v2234 = vadd.f32 %v2232, %v2233
  %2235 = vadd.xlane.f32.xlu0 %v2234
  %v2236 = vpop.xlane.xlu0 %2235
  %v2237 = vsel %vm141, %v1345, 0.0
  %v2238 = vsel %vm141, %v1873, 0.0
  %v2239 = vadd.f32 %v2237, %v2238
  %2240 = vadd.xlane.f32.xlu0 %v2239
  %v2241 = vpop.xlane.xlu0 %2240
  %v2242 = vsel %vm141, %v1355, 0.0
  %v2243 = vsel %vm141, %v1883, 0.0
  %v2244 = vadd.f32 %v2242, %v2243
  %2245 = vadd.xlane.f32.xlu0 %v2244
  %v2246 = vpop.xlane.xlu0 %2245
  %v2247 = vsel %vm141, %v1352, 0.0
  %v2248 = vsel %vm141, %v1880, 0.0
  %v2249 = vadd.f32 %v2247, %v2248
  %2250 = vadd.xlane.f32.xlu0 %v2249
  %v2251 = vpop.xlane.xlu0 %2250
  %v2252 = vsel %vm141, %v1356, 0.0
  %v2253 = vsel %vm141, %v1884, 0.0
  %v2254 = vadd.f32 %v2252, %v2253
  %2255 = vadd.xlane.f32.xlu0 %v2254
  %v2256 = vpop.xlane.xlu0 %2255
  %v2257 = vsel %vm141, %v1395, 0.0
  %v2258 = vsel %vm141, %v1923, 0.0
  %v2259 = vadd.f32 %v2257, %v2258
  %2260 = vadd.xlane.f32.xlu0 %v2259
  %v2261 = vpop.xlane.xlu0 %2260
  %v2262 = vsel %vm141, %v1419, 0.0
  %v2263 = vsel %vm141, %v1947, 0.0
  %v2264 = vadd.f32 %v2262, %v2263
  %2265 = vadd.xlane.f32.xlu0 %v2264
  %v2266 = vpop.xlane.xlu0 %2265
  %v2267 = vsel %vm141, %v1402, 0.0
  %v2268 = vsel %vm141, %v1930, 0.0
  %v2269 = vadd.f32 %v2267, %v2268
  %2270 = vadd.xlane.f32.xlu0 %v2269
  %v2271 = vpop.xlane.xlu0 %2270
  %v2272 = vsel %vm141, %v1420, 0.0
  %v2273 = vsel %vm141, %v1948, 0.0
  %v2274 = vadd.f32 %v2272, %v2273
  %2275 = vadd.xlane.f32.xlu0 %v2274
  %v2276 = vpop.xlane.xlu0 %2275
  %v2277 = vsel %vm141, %v1411, 0.0
  %v2278 = vsel %vm141, %v1939, 0.0
  %v2279 = vadd.f32 %v2277, %v2278
  %2280 = vadd.xlane.f32.xlu0 %v2279
  %v2281 = vpop.xlane.xlu0 %2280
  %v2282 = vsel %vm141, %v1421, 0.0
  %v2283 = vsel %vm141, %v1949, 0.0
  %v2284 = vadd.f32 %v2282, %v2283
  %2285 = vadd.xlane.f32.xlu0 %v2284
  %v2286 = vpop.xlane.xlu0 %2285
  %v2287 = vsel %vm141, %v1418, 0.0
  %v2288 = vsel %vm141, %v1946, 0.0
  %v2289 = vadd.f32 %v2287, %v2288
  %2290 = vadd.xlane.f32.xlu0 %v2289
  %v2291 = vpop.xlane.xlu0 %2290
  %v2292 = vsel %vm141, %v1422, 0.0
  %v2293 = vsel %vm141, %v1950, 0.0
  %v2294 = vadd.f32 %v2292, %v2293
  %2295 = vadd.xlane.f32.xlu0 %v2294
  %v2296 = vpop.xlane.xlu0 %2295
  %v2297 = vsel %vm141, %v1461, 0.0
  %v2298 = vsel %vm141, %v1989, 0.0
  %v2299 = vadd.f32 %v2297, %v2298
  %2300 = vadd.xlane.f32.xlu0 %v2299
  %v2301 = vpop.xlane.xlu0 %2300
  %v2302 = vsel %vm141, %v1485, 0.0
  %v2303 = vsel %vm141, %v2013, 0.0
  %v2304 = vadd.f32 %v2302, %v2303
  %2305 = vadd.xlane.f32.xlu0 %v2304
  %v2306 = vpop.xlane.xlu0 %2305
  %v2307 = vsel %vm141, %v1468, 0.0
  %v2308 = vsel %vm141, %v1996, 0.0
  %v2309 = vadd.f32 %v2307, %v2308
  %2310 = vadd.xlane.f32.xlu0 %v2309
  %v2311 = vpop.xlane.xlu0 %2310
  %v2312 = vsel %vm141, %v1486, 0.0
  %v2313 = vsel %vm141, %v2014, 0.0
  %v2314 = vadd.f32 %v2312, %v2313
  %2315 = vadd.xlane.f32.xlu0 %v2314
  %v2316 = vpop.xlane.xlu0 %2315
  %v2317 = vsel %vm141, %v1477, 0.0
  %v2318 = vsel %vm141, %v2005, 0.0
  %v2319 = vadd.f32 %v2317, %v2318
  %2320 = vadd.xlane.f32.xlu0 %v2319
  %v2321 = vpop.xlane.xlu0 %2320
  %v2322 = vsel %vm141, %v1487, 0.0
  %v2323 = vsel %vm141, %v2015, 0.0
  %v2324 = vadd.f32 %v2322, %v2323
  %2325 = vadd.xlane.f32.xlu0 %v2324
  %v2326 = vpop.xlane.xlu0 %2325
  %v2327 = vsel %vm141, %v1484, 0.0
  %v2328 = vsel %vm141, %v2012, 0.0
  %v2329 = vadd.f32 %v2327, %v2328
  %2330 = vadd.xlane.f32.xlu0 %v2329
  %v2331 = vpop.xlane.xlu0 %2330
  %v2332 = vsel %vm141, %v1488, 0.0
  %v2333 = vsel %vm141, %v2016, 0.0
  %v2334 = vadd.f32 %v2332, %v2333
  %2335 = vadd.xlane.f32.xlu0 %v2334
  %v2336 = vpop.xlane.xlu0 %2335
  %v2337 = vmul.f32 %v2021, 0.00390625
  %v2338 = vmul.f32 %v2026, 0.00390625
  %v2339 = vmul.f32 %v2031, 0.00390625
  %v2340 = vmul.f32 %v2036, 0.00390625
  %v2341 = vmul.f32 %v2041, 0.00390625
  %v2342 = vmul.f32 %v2046, 0.00390625
  %v2343 = vmul.f32 %v2051, 0.00390625
  %v2344 = vmul.f32 %v2056, 0.00390625
  %v2345 = vmul.f32 %v2061, 0.00390625
  %v2346 = vmul.f32 %v2066, 0.00390625
  %v2347 = vmul.f32 %v2071, 0.00390625
  %v2348 = vmul.f32 %v2076, 0.00390625
  %v2349 = vmul.f32 %v2081, 0.00390625
  %v2350 = vmul.f32 %v2086, 0.00390625
  %v2351 = vmul.f32 %v2091, 0.00390625
  %v2352 = vmul.f32 %v2096, 0.00390625
  %v2353 = vmul.f32 %v2101, 0.00390625
  %v2354 = vmul.f32 %v2106, 0.00390625
  %v2355 = vmul.f32 %v2111, 0.00390625
  %v2356 = vmul.f32 %v2116, 0.00390625
  %v2357 = vmul.f32 %v2121, 0.00390625
  %v2358 = vmul.f32 %v2126, 0.00390625
  %v2359 = vmul.f32 %v2131, 0.00390625
  %v2360 = vmul.f32 %v2136, 0.00390625
  %v2361 = vmul.f32 %v2141, 0.00390625
  %v2362 = vmul.f32 %v2146, 0.00390625
  %v2363 = vmul.f32 %v2151, 0.00390625
  %v2364 = vmul.f32 %v2156, 0.00390625
  %v2365 = vmul.f32 %v2161, 0.00390625
  %v2366 = vmul.f32 %v2166, 0.00390625
  %v2367 = vmul.f32 %v2171, 0.00390625
  %v2368 = vmul.f32 %v2176, 0.00390625
  %v2369 = vmul.f32 %v2181, 0.00390625
  %v2370 = vmul.f32 %v2186, 0.00390625
  %v2371 = vmul.f32 %v2191, 0.00390625
  %v2372 = vmul.f32 %v2196, 0.00390625
  %v2373 = vmul.f32 %v2201, 0.00390625
  %v2374 = vmul.f32 %v2206, 0.00390625
  %v2375 = vmul.f32 %v2211, 0.00390625
  %v2376 = vmul.f32 %v2216, 0.00390625
  %v2377 = vmul.f32 %v2221, 0.00390625
  %v2378 = vmul.f32 %v2226, 0.00390625
  %v2379 = vmul.f32 %v2231, 0.00390625
  %v2380 = vmul.f32 %v2236, 0.00390625
  %v2381 = vmul.f32 %v2241, 0.00390625
  %v2382 = vmul.f32 %v2246, 0.00390625
  %v2383 = vmul.f32 %v2251, 0.00390625
  %v2384 = vmul.f32 %v2256, 0.00390625
  %v2385 = vmul.f32 %v2261, 0.00390625
  %v2386 = vmul.f32 %v2266, 0.00390625
  %v2387 = vmul.f32 %v2271, 0.00390625
  %v2388 = vmul.f32 %v2276, 0.00390625
  %v2389 = vmul.f32 %v2281, 0.00390625
  %v2390 = vmul.f32 %v2286, 0.00390625
  %v2391 = vmul.f32 %v2291, 0.00390625
  %v2392 = vmul.f32 %v2296, 0.00390625
  %v2393 = vmul.f32 %v2301, 0.00390625
  %v2394 = vmul.f32 %v2306, 0.00390625
  %v2395 = vmul.f32 %v2311, 0.00390625
  %v2396 = vmul.f32 %v2316, 0.00390625
  %v2397 = vmul.f32 %v2321, 0.00390625
  %v2398 = vmul.f32 %v2326, 0.00390625
  %v2399 = vmul.f32 %v2331, 0.00390625
  %v2400 = vmul.f32 %v2336, 0.00390625
  %v2401 = vld [vmem:[%s7] sm:$0xff]
  %v2402 = vld [vmem:[%s7 + $0x8] sm:$0x3]
  %v2403 = vld [vmem:[%s8] sm:$0xff]
  %v2404 = vld [vmem:[%s8 + $0x8] sm:$0x3]
  %2406 = vset.pattern.permute.xlu0 0
  %2407 = vperm.xlu0 %2406, %v2403
  %v2408 = vpop.permute.xlu0 %2407
  %2411 = vset.pattern.permute.xlu0 0
  %2412 = vperm.xlu0 %2411, %v2404
  %v2413 = vpop.permute.xlu0 %2412
  %v2479 = vlaneseq
  %v2480 = vand.u32 %v2479, 127
  %v2481 = vlaneseq
  %v2482 = vshrl.u32 %v2481, 7
  %v2483 = vsub.s32 %v2480, %v2482
  %v2484 = vrot.slane %v2337, %v2483
  %v2485 = vlaneseq
  %v2486 = vshrl.u32 %v2485, 7
  %v2487 = vsub.s32 %v2480, %v2486
  %v2488 = vrot.slane %v2338, %v2487
  %v2489 = vlaneseq
  %v2490 = vshrl.u32 %v2489, 7
  %v2491 = vsub.s32 %v2480, %v2490
  %v2492 = vrot.slane %v2339, %v2491
  %v2493 = vlaneseq
  %v2494 = vshrl.u32 %v2493, 7
  %v2495 = vsub.s32 %v2480, %v2494
  %v2496 = vrot.slane %v2340, %v2495
  %v2497 = vlaneseq
  %v2498 = vshrl.u32 %v2497, 7
  %v2499 = vsub.s32 %v2480, %v2498
  %v2500 = vrot.slane %v2341, %v2499
  %v2501 = vlaneseq
  %v2502 = vshrl.u32 %v2501, 7
  %v2503 = vsub.s32 %v2480, %v2502
  %v2504 = vrot.slane %v2342, %v2503
  %v2505 = vlaneseq
  %v2506 = vshrl.u32 %v2505, 7
  %v2507 = vsub.s32 %v2480, %v2506
  %v2508 = vrot.slane %v2343, %v2507
  %v2509 = vlaneseq
  %v2510 = vshrl.u32 %v2509, 7
  %v2511 = vsub.s32 %v2480, %v2510
  %v2512 = vrot.slane %v2344, %v2511
  %v2513 = vlaneseq
  %v2514 = vshrl.u32 %v2513, 7
  %v2515 = vsub.s32 %v2480, %v2514
  %v2516 = vrot.slane %v2345, %v2515
  %v2517 = vlaneseq
  %v2518 = vshrl.u32 %v2517, 7
  %v2519 = vsub.s32 %v2480, %v2518
  %v2520 = vrot.slane %v2346, %v2519
  %v2521 = vlaneseq
  %v2522 = vshrl.u32 %v2521, 7
  %v2523 = vsub.s32 %v2480, %v2522
  %v2524 = vrot.slane %v2347, %v2523
  %v2525 = vlaneseq
  %v2526 = vshrl.u32 %v2525, 7
  %v2527 = vsub.s32 %v2480, %v2526
  %v2528 = vrot.slane %v2348, %v2527
  %v2529 = vlaneseq
  %v2530 = vshrl.u32 %v2529, 7
  %v2531 = vsub.s32 %v2480, %v2530
  %v2532 = vrot.slane %v2349, %v2531
  %v2533 = vlaneseq
  %v2534 = vshrl.u32 %v2533, 7
  %v2535 = vsub.s32 %v2480, %v2534
  %v2536 = vrot.slane %v2350, %v2535
  %v2537 = vlaneseq
  %v2538 = vshrl.u32 %v2537, 7
  %v2539 = vsub.s32 %v2480, %v2538
  %v2540 = vrot.slane %v2351, %v2539
  %v2541 = vlaneseq
  %v2542 = vshrl.u32 %v2541, 7
  %v2543 = vsub.s32 %v2480, %v2542
  %v2544 = vrot.slane %v2352, %v2543
  %v2545 = vlaneseq
  %v2546 = vshrl.u32 %v2545, 7
  %v2547 = vsub.s32 %v2480, %v2546
  %v2548 = vrot.slane %v2353, %v2547
  %v2549 = vlaneseq
  %v2550 = vshrl.u32 %v2549, 7
  %v2551 = vsub.s32 %v2480, %v2550
  %v2552 = vrot.slane %v2354, %v2551
  %v2553 = vlaneseq
  %v2554 = vshrl.u32 %v2553, 7
  %v2555 = vsub.s32 %v2480, %v2554
  %v2556 = vrot.slane %v2355, %v2555
  %v2557 = vlaneseq
  %v2558 = vshrl.u32 %v2557, 7
  %v2559 = vsub.s32 %v2480, %v2558
  %v2560 = vrot.slane %v2356, %v2559
  %v2561 = vlaneseq
  %v2562 = vshrl.u32 %v2561, 7
  %v2563 = vsub.s32 %v2480, %v2562
  %v2564 = vrot.slane %v2357, %v2563
  %v2565 = vlaneseq
  %v2566 = vshrl.u32 %v2565, 7
  %v2567 = vsub.s32 %v2480, %v2566
  %v2568 = vrot.slane %v2358, %v2567
  %v2569 = vlaneseq
  %v2570 = vshrl.u32 %v2569, 7
  %v2571 = vsub.s32 %v2480, %v2570
  %v2572 = vrot.slane %v2359, %v2571
  %v2573 = vlaneseq
  %v2574 = vshrl.u32 %v2573, 7
  %v2575 = vsub.s32 %v2480, %v2574
  %v2576 = vrot.slane %v2360, %v2575
  %v2577 = vlaneseq
  %v2578 = vshrl.u32 %v2577, 7
  %v2579 = vsub.s32 %v2480, %v2578
  %v2580 = vrot.slane %v2361, %v2579
  %v2581 = vlaneseq
  %v2582 = vshrl.u32 %v2581, 7
  %v2583 = vsub.s32 %v2480, %v2582
  %v2584 = vrot.slane %v2362, %v2583
  %v2585 = vlaneseq
  %v2586 = vshrl.u32 %v2585, 7
  %v2587 = vsub.s32 %v2480, %v2586
  %v2588 = vrot.slane %v2363, %v2587
  %v2589 = vlaneseq
  %v2590 = vshrl.u32 %v2589, 7
  %v2591 = vsub.s32 %v2480, %v2590
  %v2592 = vrot.slane %v2364, %v2591
  %v2593 = vlaneseq
  %v2594 = vshrl.u32 %v2593, 7
  %v2595 = vsub.s32 %v2480, %v2594
  %v2596 = vrot.slane %v2365, %v2595
  %v2597 = vlaneseq
  %v2598 = vshrl.u32 %v2597, 7
  %v2599 = vsub.s32 %v2480, %v2598
  %v2600 = vrot.slane %v2366, %v2599
  %v2601 = vlaneseq
  %v2602 = vshrl.u32 %v2601, 7
  %v2603 = vsub.s32 %v2480, %v2602
  %v2604 = vrot.slane %v2367, %v2603
  %v2605 = vlaneseq
  %v2606 = vshrl.u32 %v2605, 7
  %v2607 = vsub.s32 %v2480, %v2606
  %v2608 = vrot.slane %v2368, %v2607
  %v2609 = vlaneseq
  %v2610 = vshrl.u32 %v2609, 7
  %v2611 = vsub.s32 %v2480, %v2610
  %v2612 = vrot.slane %v2369, %v2611
  %v2613 = vlaneseq
  %v2614 = vshrl.u32 %v2613, 7
  %v2615 = vsub.s32 %v2480, %v2614
  %v2616 = vrot.slane %v2370, %v2615
  %v2617 = vlaneseq
  %v2618 = vshrl.u32 %v2617, 7
  %v2619 = vsub.s32 %v2480, %v2618
  %v2620 = vrot.slane %v2371, %v2619
  %v2621 = vlaneseq
  %v2622 = vshrl.u32 %v2621, 7
  %v2623 = vsub.s32 %v2480, %v2622
  %v2624 = vrot.slane %v2372, %v2623
  %v2625 = vlaneseq
  %v2626 = vshrl.u32 %v2625, 7
  %v2627 = vsub.s32 %v2480, %v2626
  %v2628 = vrot.slane %v2373, %v2627
  %v2629 = vlaneseq
  %v2630 = vshrl.u32 %v2629, 7
  %v2631 = vsub.s32 %v2480, %v2630
  %v2632 = vrot.slane %v2374, %v2631
  %v2633 = vlaneseq
  %v2634 = vshrl.u32 %v2633, 7
  %v2635 = vsub.s32 %v2480, %v2634
  %v2636 = vrot.slane %v2375, %v2635
  %v2637 = vlaneseq
  %v2638 = vshrl.u32 %v2637, 7
  %v2639 = vsub.s32 %v2480, %v2638
  %v2640 = vrot.slane %v2376, %v2639
  %v2641 = vlaneseq
  %v2642 = vshrl.u32 %v2641, 7
  %v2643 = vsub.s32 %v2480, %v2642
  %v2644 = vrot.slane %v2377, %v2643
  %v2645 = vlaneseq
  %v2646 = vshrl.u32 %v2645, 7
  %v2647 = vsub.s32 %v2480, %v2646
  %v2648 = vrot.slane %v2378, %v2647
  %v2649 = vlaneseq
  %v2650 = vshrl.u32 %v2649, 7
  %v2651 = vsub.s32 %v2480, %v2650
  %v2652 = vrot.slane %v2379, %v2651
  %v2653 = vlaneseq
  %v2654 = vshrl.u32 %v2653, 7
  %v2655 = vsub.s32 %v2480, %v2654
  %v2656 = vrot.slane %v2380, %v2655
  %v2657 = vlaneseq
  %v2658 = vshrl.u32 %v2657, 7
  %v2659 = vsub.s32 %v2480, %v2658
  %v2660 = vrot.slane %v2381, %v2659
  %v2661 = vlaneseq
  %v2662 = vshrl.u32 %v2661, 7
  %v2663 = vsub.s32 %v2480, %v2662
  %v2664 = vrot.slane %v2382, %v2663
  %v2665 = vlaneseq
  %v2666 = vshrl.u32 %v2665, 7
  %v2667 = vsub.s32 %v2480, %v2666
  %v2668 = vrot.slane %v2383, %v2667
  %v2669 = vlaneseq
  %v2670 = vshrl.u32 %v2669, 7
  %v2671 = vsub.s32 %v2480, %v2670
  %v2672 = vrot.slane %v2384, %v2671
  %v2673 = vlaneseq
  %v2674 = vshrl.u32 %v2673, 7
  %v2675 = vsub.s32 %v2480, %v2674
  %v2676 = vrot.slane %v2385, %v2675
  %v2677 = vlaneseq
  %v2678 = vshrl.u32 %v2677, 7
  %v2679 = vsub.s32 %v2480, %v2678
  %v2680 = vrot.slane %v2386, %v2679
  %v2681 = vlaneseq
  %v2682 = vshrl.u32 %v2681, 7
  %v2683 = vsub.s32 %v2480, %v2682
  %v2684 = vrot.slane %v2387, %v2683
  %v2685 = vlaneseq
  %v2686 = vshrl.u32 %v2685, 7
  %v2687 = vsub.s32 %v2480, %v2686
  %v2688 = vrot.slane %v2388, %v2687
  %v2689 = vlaneseq
  %v2690 = vshrl.u32 %v2689, 7
  %v2691 = vsub.s32 %v2480, %v2690
  %v2692 = vrot.slane %v2389, %v2691
  %v2693 = vlaneseq
  %v2694 = vshrl.u32 %v2693, 7
  %v2695 = vsub.s32 %v2480, %v2694
  %v2696 = vrot.slane %v2390, %v2695
  %v2697 = vlaneseq
  %v2698 = vshrl.u32 %v2697, 7
  %v2699 = vsub.s32 %v2480, %v2698
  %v2700 = vrot.slane %v2391, %v2699
  %v2701 = vlaneseq
  %v2702 = vshrl.u32 %v2701, 7
  %v2703 = vsub.s32 %v2480, %v2702
  %v2704 = vrot.slane %v2392, %v2703
  %v2705 = vlaneseq
  %v2706 = vshrl.u32 %v2705, 7
  %v2707 = vsub.s32 %v2480, %v2706
  %v2708 = vrot.slane %v2393, %v2707
  %v2709 = vlaneseq
  %v2710 = vshrl.u32 %v2709, 7
  %v2711 = vsub.s32 %v2480, %v2710
  %v2712 = vrot.slane %v2394, %v2711
  %v2713 = vlaneseq
  %v2714 = vshrl.u32 %v2713, 7
  %v2715 = vsub.s32 %v2480, %v2714
  %v2716 = vrot.slane %v2395, %v2715
  %v2717 = vlaneseq
  %v2718 = vshrl.u32 %v2717, 7
  %v2719 = vsub.s32 %v2480, %v2718
  %v2720 = vrot.slane %v2396, %v2719
  %v2721 = vlaneseq
  %v2722 = vshrl.u32 %v2721, 7
  %v2723 = vsub.s32 %v2480, %v2722
  %v2724 = vrot.slane %v2397, %v2723
  %v2725 = vlaneseq
  %v2726 = vshrl.u32 %v2725, 7
  %v2727 = vsub.s32 %v2480, %v2726
  %v2728 = vrot.slane %v2398, %v2727
  %v2729 = vlaneseq
  %v2730 = vshrl.u32 %v2729, 7
  %v2731 = vsub.s32 %v2480, %v2730
  %v2732 = vrot.slane %v2399, %v2731
  %v2733 = vlaneseq
  %v2734 = vshrl.u32 %v2733, 7
  %v2735 = vsub.s32 %v2480, %v2734
  %v2736 = vrot.slane %v2400, %v2735
  %vm2737 = vcmask 1041409
  %v2738 = vsel %vm2737, %v2488, %v2484
  %vm2739 = vcmask 1042434
  %v2740 = vsel %vm2739, %v2492, %v2738
  %vm2741 = vcmask 1043459
  %v2742 = vsel %vm2741, %v2496, %v2740
  %vm2743 = vcmask 1044484
  %v2744 = vsel %vm2743, %v2500, %v2742
  %vm2745 = vcmask 1045509
  %v2746 = vsel %vm2745, %v2504, %v2744
  %vm2747 = vcmask 1046534
  %v2748 = vsel %vm2747, %v2508, %v2746
  %vm2749 = vcmask 1047559
  %v2750 = vsel %vm2749, %v2512, %v2748
  %v2751 = vsel %vm2737, %v2520, %v2516
  %v2752 = vsel %vm2739, %v2524, %v2751
  %v2753 = vsel %vm2741, %v2528, %v2752
  %v2754 = vsel %vm2743, %v2532, %v2753
  %v2755 = vsel %vm2745, %v2536, %v2754
  %v2756 = vsel %vm2747, %v2540, %v2755
  %v2757 = vsel %vm2749, %v2544, %v2756
  %v2758 = vsel %vm2737, %v2552, %v2548
  %v2759 = vsel %vm2739, %v2556, %v2758
  %v2760 = vsel %vm2741, %v2560, %v2759
  %v2761 = vsel %vm2743, %v2564, %v2760
  %v2762 = vsel %vm2745, %v2568, %v2761
  %v2763 = vsel %vm2747, %v2572, %v2762
  %v2764 = vsel %vm2749, %v2576, %v2763
  %v2765 = vsel %vm2737, %v2584, %v2580
  %v2766 = vsel %vm2739, %v2588, %v2765
  %v2767 = vsel %vm2741, %v2592, %v2766
  %v2768 = vsel %vm2743, %v2596, %v2767
  %v2769 = vsel %vm2745, %v2600, %v2768
  %v2770 = vsel %vm2747, %v2604, %v2769
  %v2771 = vsel %vm2749, %v2608, %v2770
  %v2772 = vsel %vm2737, %v2616, %v2612
  %v2773 = vsel %vm2739, %v2620, %v2772
  %v2774 = vsel %vm2741, %v2624, %v2773
  %v2775 = vsel %vm2743, %v2628, %v2774
  %v2776 = vsel %vm2745, %v2632, %v2775
  %v2777 = vsel %vm2747, %v2636, %v2776
  %v2778 = vsel %vm2749, %v2640, %v2777
  %v2779 = vsel %vm2737, %v2648, %v2644
  %v2780 = vsel %vm2739, %v2652, %v2779
  %v2781 = vsel %vm2741, %v2656, %v2780
  %v2782 = vsel %vm2743, %v2660, %v2781
  %v2783 = vsel %vm2745, %v2664, %v2782
  %v2784 = vsel %vm2747, %v2668, %v2783
  %v2785 = vsel %vm2749, %v2672, %v2784
  %v2786 = vsel %vm2737, %v2680, %v2676
  %v2787 = vsel %vm2739, %v2684, %v2786
  %v2788 = vsel %vm2741, %v2688, %v2787
  %v2789 = vsel %vm2743, %v2692, %v2788
  %v2790 = vsel %vm2745, %v2696, %v2789
  %v2791 = vsel %vm2747, %v2700, %v2790
  %v2792 = vsel %vm2749, %v2704, %v2791
  %v2793 = vsel %vm2737, %v2712, %v2708
  %v2794 = vsel %vm2739, %v2716, %v2793
  %v2795 = vsel %vm2741, %v2720, %v2794
  %v2796 = vsel %vm2743, %v2724, %v2795
  %v2797 = vsel %vm2745, %v2728, %v2796
  %v2798 = vsel %vm2747, %v2732, %v2797
  %v2799 = vsel %vm2749, %v2736, %v2798
  %v2809 = vsel %vm424, %v2401, 0
  %v2812 = vsel %vm424, %v2402, 0
  %2814 = vmatprep.subr.mxu0 0.0
  %2815 = vmatpush1.msra.mxu0 %v2750
  %2816 = vmatprep.subr.mxu0 0.0
  %2817 = vmatpush1.msra.mxu0 %v2757
  %2818 = vmatprep.subr.mxu0 0.0
  %2819 = vmatpush1.msra.mxu0 %v2764
  %2820 = vmatprep.subr.mxu0 0.0
  %2821 = vmatpush1.msra.mxu0 %v2771
  %2822 = vmatprep.subr.mxu0 0.0
  %2823 = vmatpush1.msra.mxu0 %v2778
  %2824 = vmatprep.subr.mxu0 0.0
  %2825 = vmatpush1.msra.mxu0 %v2785
  %2826 = vmatprep.subr.mxu0 0.0
  %2827 = vmatpush1.msra.mxu0 %v2792
  %2828 = vmatprep.subr.mxu0 0.0
  %2829 = vmatpush1.msra.mxu0 %v2799
  %2830 = vmatprep.subr.mxu0 0.0
  %2831 = vmatpush1.msra.mxu0 0.0
  %2832 = vmatprep.subr.mxu0 0.0
  %2833 = vmatpush1.msra.mxu0 0.0
  %2834 = vmatprep.subr.mxu0 0.0
  %2835 = vmatpush1.msra.mxu0 0.0
  %2836 = vmatprep.subr.mxu0 0.0
  %2837 = vmatpush1.msra.mxu0 0.0
  %2838 = vmatprep.subr.mxu0 0.0
  %2839 = vmatpush1.msra.mxu0 0.0
  %2840 = vmatprep.subr.mxu0 0.0
  %2841 = vmatpush1.msra.mxu0 0.0
  %2842 = vmatprep.subr.mxu0 0.0
  %2843 = vmatpush1.msra.mxu0 0.0
  %2844 = vmatprep.subr.mxu0 0.0
  %2845 = vmatpush1.msra.mxu0 0.0
  %2846 = vmatprep.subr.mxu0 0.0
  %2847 = vmatpush1.msra.mxu0 0.0
  %2848 = vmatprep.subr.mxu0 0.0
  %2849 = vmatpush1.msra.mxu0 0.0
  %2850 = vmatprep.subr.mxu0 0.0
  %2851 = vmatpush1.msra.mxu0 0.0
  %2852 = vmatprep.subr.mxu0 0.0
  %2853 = vmatpush1.msra.mxu0 0.0
  %2854 = vmatprep.subr.mxu0 0.0
  %2855 = vmatpush1.msra.mxu0 0.0
  %2856 = vmatprep.subr.mxu0 0.0
  %2857 = vmatpush1.msra.mxu0 0.0
  %2858 = vmatprep.subr.mxu0 0.0
  %2859 = vmatpush1.msra.mxu0 0.0
  %2860 = vmatprep.subr.mxu0 0.0
  %2861 = vmatpush1.msra.mxu0 0.0
  %2862 = vmatprep.subr.mxu0 0.0
  %2863 = vmatpush1.msra.mxu0 0.0
  %2864 = vmatprep.subr.mxu0 0.0
  %2865 = vmatpush1.msra.mxu0 0.0
  %2866 = vmatprep.subr.mxu0 0.0
  %2867 = vmatpush1.msra.mxu0 0.0
  %2868 = vmatprep.subr.mxu0 0.0
  %2869 = vmatpush1.msra.mxu0 0.0
  %2870 = vmatprep.subr.mxu0 0.0
  %2871 = vmatpush1.msra.mxu0 0.0
  %2872 = vmatprep.subr.mxu0 0.0
  %2873 = vmatpush1.msra.mxu0 0.0
  %2874 = vmatprep.subr.mxu0 0.0
  %2875 = vmatpush1.msra.mxu0 0.0
  %2876 = vmatprep.subr.mxu0 0.0
  %2877 = vmatpush1.msra.mxu0 0.0
  %2878 = vmatprep.mubr.f32.mxu0 0.0
  %2879 = vmatmul.mubr.f32.gmra.mrb[0].mxu0 %v2809
  %v2880 = vpop.f32.mrb[0].mxu0
  %v2881 = vadd.f32 %v2408, %v2880
  %v2882 = vpop.f32.mrb[0].mxu0
  %2883 = vmatprep.mubr.f32.mxu0 0.0
  %2884 = vmatmul.mubr.f32.gmra.mrb[0].mxu0 %v2812
  %v2885 = vpop.f32.mrb[0].mxu0
  %v2886 = vadd.f32 %v2413, %v2885
  %v2887 = vpop.f32.mrb[0].mxu0
  %2888 = vdwg.mxu0
  %vm2889 = vcmask 15360
  %2890 = vst.msk [vmem:[%s9] sm:$0xff] %vm2889, %v2881
  %vm2891 = vcmask 9216
  %2892 = vst.msk [vmem:[%s9 + $0x8] sm:$0x3] %vm2891, %v2886
  // Predicated region
  $region38: #{concat_resnet_forward.1} parent=0 // pred_check
    _
  $region39: #{concat_resnet_forward.1} parent=0 // pred_check_branch
    %2894 = sbr.rel (0) target = $region41
  $region40: #{concat_resnet_forward.1} parent=0 // pred_region
    _
  $region41: #{concat_resnet_forward.1} parent=0 // pred_fallthru
    _
  // Predicated region
  $region42: #{concat_resnet_forward.1} parent=0 // pred_check
    _
  $region43: #{concat_resnet_forward.1} parent=0 // pred_check_branch
    %2896 = sbr.rel (0) target = $region45
  $region44: #{concat_resnet_forward.1} parent=0 // pred_region
    _
  $region45: #{concat_resnet_forward.1} parent=0 // pred_fallthru
    _

</llo_original>
